<compile_context>
chip_gen: v7x
topology: tpu7x:2x2x1
jax: 0.10.0
libtpu: 0.0.40
codegen_flags: <defaults>
</compile_context>

<pallas_src>
import math
import functools

import jax
import jax.numpy as jnp
from jax.experimental import pallas as pl
from jax.experimental.pallas import tpu as pltpu


def _resnet_block_kernel(x_ref, w1_ref, g1_ref, be1_ref,
                         w2_ref, g2_ref, be2_ref,
                         out_ref, xpad_ref, patch_ref):
    """Fully fused ResNet block; whole problem lives in VMEM, grid = ()."""
    B, Hd, Wd, C = x_ref.shape
    N = B * Hd * Wd
    inv_n = 1.0 / N

    # Zero the padded scratch once; the 1-pixel border stays zero for BOTH
    # conv stages (interior is overwritten each time).
    xpad_ref[...] = jnp.zeros(xpad_ref.shape, xpad_ref.dtype)
    xpad_ref[:, 1:Hd + 1, 1:Wd + 1, :] = x_ref[...]

    def conv3x3(w):
        # im2col: build (N, 9*C) patch matrix in VMEM, one MXU matmul (K=9*C).
        xpad = xpad_ref[...]
        for idx in range(9):
            dy, dx = idx // 3, idx % 3
            patch_ref[:, idx * C:(idx + 1) * C] = (
                xpad[:, dy:dy + Hd, dx:dx + Wd, :].reshape(N, C))
        return jnp.dot(patch_ref[...], w, preferred_element_type=jnp.float32)

    def batchnorm(y, g, be):
        # Single-pass batch stats (biased variance, eps=1e-5), fused scale/shift.
        s = jnp.sum(y, axis=0, keepdims=True)           # (1, C)
        ss = jnp.sum(y * y, axis=0, keepdims=True)      # (1, C)
        mean = s * inv_n
        var = ss * inv_n - mean * mean
        scale = g * jax.lax.rsqrt(var + 1e-5)
        shift = be - mean * scale
        return y * scale + shift

    # stage 1: conv1 + bn1 + leaky_relu (slope 0.01)
    h = batchnorm(conv3x3(w1_ref[...]), g1_ref[...], be1_ref[...])
    h = jnp.where(h > 0, h, 0.01 * h)

    # stage 2: re-pad h in place (border still zero), conv2 + bn2
    xpad_ref[:, 1:Hd + 1, 1:Wd + 1, :] = h.reshape(B, Hd, Wd, C)
    y = batchnorm(conv3x3(w2_ref[...]), g2_ref[...], be2_ref[...])

    # residual add and writeback
    y = y + x_ref[...].reshape(N, C)
    out_ref[...] = y.reshape(out_ref.shape).astype(out_ref.dtype)


def _resnet_block_pallas(x_nhwc, w1r, g1, be1, w2r, g2, be2, out_shape):
    B, Hd, Wd, C = x_nhwc.shape
    vm = pl.BlockSpec(memory_space=pltpu.MemorySpace.VMEM)
    return pl.pallas_call(
        _resnet_block_kernel,
        out_shape=jax.ShapeDtypeStruct(out_shape, jnp.float32),
        in_specs=[vm] * 7,
        out_specs=vm,
        scratch_shapes=[
            pltpu.VMEM((B, Hd + 2, Wd + 2, C), jnp.float32),   # padded buffer
            pltpu.VMEM((B * Hd * Wd, 9 * C), jnp.float32),     # im2col patches
        ],
    )(x_nhwc, w1r, g1, be1, w2r, g2, be2)


@functools.partial(jax.jit, static_argnames=())
def resnet_block(x, w1, b1, g1, be1, w2, b2, g2, be2):
    """x: (B, S, C) f32.  Conv weights w*: (3, 3, Cin, Cout) == PyTorch
    conv.weight.permute(2, 3, 1, 0).  b*, g*, be*: (1, C)."""
    B, S, C = x.shape
    idim = int(math.floor(S ** 0.5))
    assert idim * idim == S, "sequence_length must be a perfect square"
    # Conv biases b1/b2 are cancelled exactly by training-mode BN mean
    # subtraction -> not fed to the kernel (output is unchanged).
    del b1, b2
    x_nhwc = x.reshape(B, idim, idim, C)
    w1r = w1.reshape(9 * C, C)   # (dy,dx,cin) row order == in-kernel patch order
    w2r = w2.reshape(9 * C, C)
    return _resnet_block_pallas(x_nhwc, w1r, g1, be1, w2r, g2, be2, (B, S, C))


def _reference(x, w1, b1, g1, be1, w2, b2, g2, be2):
    """Pure-JAX reference mirroring the PyTorch forward (keeps the conv bias)."""
    B, S, C = x.shape
    idim = int(math.floor(S ** 0.5))
    h = x.reshape(B, idim, idim, C)

    def conv(h, w, b):
        y = jax.lax.conv_general_dilated(
            h, w, window_strides=(1, 1), padding='SAME',
            dimension_numbers=('NHWC', 'HWIO', 'NHWC'))
        return y + b.reshape(1, 1, 1, C)

    def bn(h, g, be):
        mean = h.mean(axis=(0, 1, 2), keepdims=True)
        var = ((h - mean) ** 2).mean(axis=(0, 1, 2), keepdims=True)
        return (h - mean) * jax.lax.rsqrt(var + 1e-5) * g.reshape(1, 1, 1, C) \
            + be.reshape(1, 1, 1, C)

    y = bn(conv(h, w1, b1), g1, be1)
    y = jnp.where(y > 0, y, 0.01 * y)
    y = bn(conv(y, w2, b2), g2, be2)
    return y.reshape(B, S, C) + x


if __name__ == "__main__":
    B, S, C = 2, 64, 32            # sequence_length=64 -> 8x8 spatial, dim=32
    key = jax.random.PRNGKey(0)
    kx, kw1, kb1, kw2, kb2, kg1, kg2, kbe1, kbe2 = jax.random.split(key, 9)

    x = jax.random.normal(kx, (B, S, C), jnp.float32)
    # Deterministic synthetic parameters (shapes from nn.Conv2d(dim,dim,3) /
    # nn.BatchNorm2d(dim)); conv weights stored as (kh, kw, Cin, Cout).
    w1 = 0.1 * jax.random.normal(kw1, (3, 3, C, C), jnp.float32)
    w2 = 0.1 * jax.random.normal(kw2, (3, 3, C, C), jnp.float32)
    b1 = 0.1 * jax.random.normal(kb1, (1, C), jnp.float32)
    b2 = 0.1 * jax.random.normal(kb2, (1, C), jnp.float32)
    g1 = 1.0 + 0.1 * jax.random.normal(kg1, (1, C), jnp.float32)
    g2 = 1.0 + 0.1 * jax.random.normal(kg2, (1, C), jnp.float32)
    be1 = 0.1 * jax.random.normal(kbe1, (1, C), jnp.float32)
    be2 = 0.1 * jax.random.normal(kbe2, (1, C), jnp.float32)

    out = resnet_block(x, w1, b1, g1, be1, w2, b2, g2, be2)
    out = jax.block_until_ready(out)

    ref = _reference(x, w1, b1, g1, be1, w2, b2, g2, be2)
    assert out.shape == (B, S, C)
    assert jnp.allclose(out, ref, rtol=2e-3, atol=2e-3), \
        f"max abs diff {jnp.max(jnp.abs(out - ref))}"

    print("KERNEL_OK")
</pallas_src>

<mosaic_0001>
module attributes {stable_mosaic.version = 11 : i64} {
  func.func @_resnet_block_kernel(%arg0: memref<2x8x8x32xf32, #tpu.memory_space<vmem>>, %arg1: memref<288x32xf32, #tpu.memory_space<vmem>>, %arg2: memref<1x32xf32, #tpu.memory_space<vmem>>, %arg3: memref<1x32xf32, #tpu.memory_space<vmem>>, %arg4: memref<288x32xf32, #tpu.memory_space<vmem>>, %arg5: memref<1x32xf32, #tpu.memory_space<vmem>>, %arg6: memref<1x32xf32, #tpu.memory_space<vmem>>, %arg7: memref<2x64x32xf32, #tpu.memory_space<vmem>>, %arg8: memref<2x10x10x32xf32, #tpu.memory_space<vmem>>, %arg9: memref<128x288xf32, #tpu.memory_space<vmem>>) attributes {dimension_semantics = [], scalar_prefetch = 0 : i64, scratch_operands = 2 : i64, tpu.core_type = #tpu.core_type<tc>} {
    %cst = arith.constant 0.000000e+00 : f32
    %0 = vector.broadcast %cst : f32 to vector<2x10x10x32xf32>
    %c0 = arith.constant 0 : index
    %c0_0 = arith.constant 0 : index
    %c0_1 = arith.constant 0 : index
    %c0_2 = arith.constant 0 : index
    %1 = vector.load %arg8[%c0, %c0_0, %c0_1, %c0_2] : memref<2x10x10x32xf32, #tpu.memory_space<vmem>>, vector<2x10x10x32xf32>
    tpu.vector_store %arg8[%c0, %c0_0, %c0_1, %c0_2], %0 {strides = array<i32>} : memref<2x10x10x32xf32, #tpu.memory_space<vmem>>, vector<2x10x10x32xf32>,
    %c0_3 = arith.constant 0 : index
    %c0_4 = arith.constant 0 : index
    %c0_5 = arith.constant 0 : index
    %c0_6 = arith.constant 0 : index
    %2 = vector.load %arg0[%c0_3, %c0_4, %c0_5, %c0_6] : memref<2x8x8x32xf32, #tpu.memory_space<vmem>>, vector<2x8x8x32xf32>
    %c0_7 = arith.constant 0 : index
    %c1 = arith.constant 1 : index
    %c1_8 = arith.constant 1 : index
    %c0_9 = arith.constant 0 : index
    %3 = vector.load %arg8[%c0_7, %c1, %c1_8, %c0_9] : memref<2x10x10x32xf32, #tpu.memory_space<vmem>>, vector<2x8x8x32xf32>
    tpu.vector_store %arg8[%c0_7, %c1, %c1_8, %c0_9], %2 {strides = array<i32>} : memref<2x10x10x32xf32, #tpu.memory_space<vmem>>, vector<2x8x8x32xf32>,
    %c0_10 = arith.constant 0 : index
    %c0_11 = arith.constant 0 : index
    %4 = vector.load %arg1[%c0_10, %c0_11] : memref<288x32xf32, #tpu.memory_space<vmem>>, vector<288x32xf32>
    %c0_12 = arith.constant 0 : index
    %c0_13 = arith.constant 0 : index
    %c0_14 = arith.constant 0 : index
    %c0_15 = arith.constant 0 : index
    %5 = vector.load %arg8[%c0_12, %c0_13, %c0_14, %c0_15] : memref<2x10x10x32xf32, #tpu.memory_space<vmem>>, vector<2x10x10x32xf32>
    %6 = vector.extract_strided_slice %5 {offsets = [0, 0, 0, 0], sizes = [2, 8, 8, 32], strides = [1, 1, 1, 1]} : vector<2x10x10x32xf32> to vector<2x8x8x32xf32>
    %7 = vector.shape_cast %6 : vector<2x8x8x32xf32> to vector<128x32xf32>
    %c0_16 = arith.constant 0 : index
    %c0_17 = arith.constant 0 : index
    %8 = vector.load %arg9[%c0_16, %c0_17] : memref<128x288xf32, #tpu.memory_space<vmem>>, vector<128x32xf32>
    tpu.vector_store %arg9[%c0_16, %c0_17], %7 {strides = array<i32>} : memref<128x288xf32, #tpu.memory_space<vmem>>, vector<128x32xf32>,
    %9 = vector.extract_strided_slice %5 {offsets = [0, 0, 1, 0], sizes = [2, 8, 8, 32], strides = [1, 1, 1, 1]} : vector<2x10x10x32xf32> to vector<2x8x8x32xf32>
    %10 = vector.shape_cast %9 : vector<2x8x8x32xf32> to vector<128x32xf32>
    %c0_18 = arith.constant 0 : index
    %c32 = arith.constant 32 : index
    %11 = vector.load %arg9[%c0_18, %c32] : memref<128x288xf32, #tpu.memory_space<vmem>>, vector<128x32xf32>
    tpu.vector_store %arg9[%c0_18, %c32], %10 {strides = array<i32>} : memref<128x288xf32, #tpu.memory_space<vmem>>, vector<128x32xf32>,
    %12 = vector.extract_strided_slice %5 {offsets = [0, 0, 2, 0], sizes = [2, 8, 8, 32], strides = [1, 1, 1, 1]} : vector<2x10x10x32xf32> to vector<2x8x8x32xf32>
    %13 = vector.shape_cast %12 : vector<2x8x8x32xf32> to vector<128x32xf32>
    %c0_19 = arith.constant 0 : index
    %c64 = arith.constant 64 : index
    %14 = vector.load %arg9[%c0_19, %c64] : memref<128x288xf32, #tpu.memory_space<vmem>>, vector<128x32xf32>
    tpu.vector_store %arg9[%c0_19, %c64], %13 {strides = array<i32>} : memref<128x288xf32, #tpu.memory_space<vmem>>, vector<128x32xf32>,
    %15 = vector.extract_strided_slice %5 {offsets = [0, 1, 0, 0], sizes = [2, 8, 8, 32], strides = [1, 1, 1, 1]} : vector<2x10x10x32xf32> to vector<2x8x8x32xf32>
    %16 = vector.shape_cast %15 : vector<2x8x8x32xf32> to vector<128x32xf32>
    %c0_20 = arith.constant 0 : index
    %c96 = arith.constant 96 : index
    %17 = vector.load %arg9[%c0_20, %c96] : memref<128x288xf32, #tpu.memory_space<vmem>>, vector<128x32xf32>
    tpu.vector_store %arg9[%c0_20, %c96], %16 {strides = array<i32>} : memref<128x288xf32, #tpu.memory_space<vmem>>, vector<128x32xf32>,
    %18 = vector.extract_strided_slice %5 {offsets = [0, 1, 1, 0], sizes = [2, 8, 8, 32], strides = [1, 1, 1, 1]} : vector<2x10x10x32xf32> to vector<2x8x8x32xf32>
    %19 = vector.shape_cast %18 : vector<2x8x8x32xf32> to vector<128x32xf32>
    %c0_21 = arith.constant 0 : index
    %c128 = arith.constant 128 : index
    %20 = vector.load %arg9[%c0_21, %c128] : memref<128x288xf32, #tpu.memory_space<vmem>>, vector<128x32xf32>
    tpu.vector_store %arg9[%c0_21, %c128], %19 {strides = array<i32>} : memref<128x288xf32, #tpu.memory_space<vmem>>, vector<128x32xf32>,
    %21 = vector.extract_strided_slice %5 {offsets = [0, 1, 2, 0], sizes = [2, 8, 8, 32], strides = [1, 1, 1, 1]} : vector<2x10x10x32xf32> to vector<2x8x8x32xf32>
    %22 = vector.shape_cast %21 : vector<2x8x8x32xf32> to vector<128x32xf32>
    %c0_22 = arith.constant 0 : index
    %c160 = arith.constant 160 : index
    %23 = vector.load %arg9[%c0_22, %c160] : memref<128x288xf32, #tpu.memory_space<vmem>>, vector<128x32xf32>
    tpu.vector_store %arg9[%c0_22, %c160], %22 {strides = array<i32>} : memref<128x288xf32, #tpu.memory_space<vmem>>, vector<128x32xf32>,
    %24 = vector.extract_strided_slice %5 {offsets = [0, 2, 0, 0], sizes = [2, 8, 8, 32], strides = [1, 1, 1, 1]} : vector<2x10x10x32xf32> to vector<2x8x8x32xf32>
    %25 = vector.shape_cast %24 : vector<2x8x8x32xf32> to vector<128x32xf32>
    %c0_23 = arith.constant 0 : index
    %c192 = arith.constant 192 : index
    %26 = vector.load %arg9[%c0_23, %c192] : memref<128x288xf32, #tpu.memory_space<vmem>>, vector<128x32xf32>
    tpu.vector_store %arg9[%c0_23, %c192], %25 {strides = array<i32>} : memref<128x288xf32, #tpu.memory_space<vmem>>, vector<128x32xf32>,
    %27 = vector.extract_strided_slice %5 {offsets = [0, 2, 1, 0], sizes = [2, 8, 8, 32], strides = [1, 1, 1, 1]} : vector<2x10x10x32xf32> to vector<2x8x8x32xf32>
    %28 = vector.shape_cast %27 : vector<2x8x8x32xf32> to vector<128x32xf32>
    %c0_24 = arith.constant 0 : index
    %c224 = arith.constant 224 : index
    %29 = vector.load %arg9[%c0_24, %c224] : memref<128x288xf32, #tpu.memory_space<vmem>>, vector<128x32xf32>
    tpu.vector_store %arg9[%c0_24, %c224], %28 {strides = array<i32>} : memref<128x288xf32, #tpu.memory_space<vmem>>, vector<128x32xf32>,
    %30 = vector.extract_strided_slice %5 {offsets = [0, 2, 2, 0], sizes = [2, 8, 8, 32], strides = [1, 1, 1, 1]} : vector<2x10x10x32xf32> to vector<2x8x8x32xf32>
    %31 = vector.shape_cast %30 : vector<2x8x8x32xf32> to vector<128x32xf32>
    %c0_25 = arith.constant 0 : index
    %c256 = arith.constant 256 : index
    %32 = vector.load %arg9[%c0_25, %c256] : memref<128x288xf32, #tpu.memory_space<vmem>>, vector<128x32xf32>
    tpu.vector_store %arg9[%c0_25, %c256], %31 {strides = array<i32>} : memref<128x288xf32, #tpu.memory_space<vmem>>, vector<128x32xf32>,
    %c0_26 = arith.constant 0 : index
    %c0_27 = arith.constant 0 : index
    %33 = vector.load %arg9[%c0_26, %c0_27] : memref<128x288xf32, #tpu.memory_space<vmem>>, vector<128x288xf32>
    %cst_28 = arith.constant dense<0.000000e+00> : vector<128x32xf32>
    %34 = tpu.matmul %33, %4, %cst_28 {dimension_numbers = #tpu.dot_dimension_numbers<[1], [0], [0], [1], [0, 0, 1, 1], [], []>} : vector<128x288xf32>, vector<288x32xf32>, vector<128x32xf32> -> vector<128x32xf32>
    %c0_29 = arith.constant 0 : index
    %c0_30 = arith.constant 0 : index
    %35 = vector.load %arg2[%c0_29, %c0_30] : memref<1x32xf32, #tpu.memory_space<vmem>>, vector<1x32xf32>
    %c0_31 = arith.constant 0 : index
    %c0_32 = arith.constant 0 : index
    %36 = vector.load %arg3[%c0_31, %c0_32] : memref<1x32xf32, #tpu.memory_space<vmem>>, vector<1x32xf32>
    %cst_33 = arith.constant dense<0.000000e+00> : vector<32xf32>
    %37 = vector.multi_reduction <add>, %34, %cst_33 [0] : vector<128x32xf32> to vector<32xf32>
    %38 = vector.shape_cast %37 : vector<32xf32> to vector<1x32xf32>
    %39 = arith.mulf %34, %34 : vector<128x32xf32>
    %cst_34 = arith.constant dense<0.000000e+00> : vector<32xf32>
    %40 = vector.multi_reduction <add>, %39, %cst_34 [0] : vector<128x32xf32> to vector<32xf32>
    %41 = vector.shape_cast %40 : vector<32xf32> to vector<1x32xf32>
    %cst_35 = arith.constant 7.812500e-03 : f32
    %42 = vector.broadcast %cst_35 : f32 to vector<1x32xf32>
    %43 = arith.mulf %38, %42 : vector<1x32xf32>
    %cst_36 = arith.constant 7.812500e-03 : f32
    %44 = vector.broadcast %cst_36 : f32 to vector<1x32xf32>
    %45 = arith.mulf %41, %44 : vector<1x32xf32>
    %46 = arith.mulf %43, %43 : vector<1x32xf32>
    %47 = arith.subf %45, %46 : vector<1x32xf32>
    %cst_37 = arith.constant 9.99999974E-6 : f32
    %48 = vector.broadcast %cst_37 : f32 to vector<1x32xf32>
    %49 = arith.addf %47, %48 : vector<1x32xf32>
    %50 = math.rsqrt %49 : vector<1x32xf32>
    %51 = arith.mulf %35, %50 : vector<1x32xf32>
    %52 = arith.mulf %43, %51 : vector<1x32xf32>
    %53 = arith.subf %36, %52 : vector<1x32xf32>
    %54 = vector.broadcast %51 : vector<1x32xf32> to vector<128x32xf32>
    %55 = arith.mulf %34, %54 : vector<128x32xf32>
    %56 = vector.broadcast %53 : vector<1x32xf32> to vector<128x32xf32>
    %57 = arith.addf %55, %56 : vector<128x32xf32>
    %cst_38 = arith.constant 0.000000e+00 : f32
    %58 = vector.broadcast %cst_38 : f32 to vector<128x32xf32>
    %59 = arith.cmpf ogt, %57, %58 : vector<128x32xf32>
    %cst_39 = arith.constant 0.00999999977 : f32
    %60 = vector.broadcast %cst_39 : f32 to vector<128x32xf32>
    %61 = arith.mulf %60, %57 : vector<128x32xf32>
    %62 = arith.select %59, %57, %61 : vector<128x32xi1>, vector<128x32xf32>
    %63 = vector.shape_cast %62 : vector<128x32xf32> to vector<2x8x8x32xf32>
    %c0_40 = arith.constant 0 : index
    %c1_41 = arith.constant 1 : index
    %c1_42 = arith.constant 1 : index
    %c0_43 = arith.constant 0 : index
    %64 = vector.load %arg8[%c0_40, %c1_41, %c1_42, %c0_43] : memref<2x10x10x32xf32, #tpu.memory_space<vmem>>, vector<2x8x8x32xf32>
    tpu.vector_store %arg8[%c0_40, %c1_41, %c1_42, %c0_43], %63 {strides = array<i32>} : memref<2x10x10x32xf32, #tpu.memory_space<vmem>>, vector<2x8x8x32xf32>,
    %c0_44 = arith.constant 0 : index
    %c0_45 = arith.constant 0 : index
    %65 = vector.load %arg4[%c0_44, %c0_45] : memref<288x32xf32, #tpu.memory_space<vmem>>, vector<288x32xf32>
    %c0_46 = arith.constant 0 : index
    %c0_47 = arith.constant 0 : index
    %c0_48 = arith.constant 0 : index
    %c0_49 = arith.constant 0 : index
    %66 = vector.load %arg8[%c0_46, %c0_47, %c0_48, %c0_49] : memref<2x10x10x32xf32, #tpu.memory_space<vmem>>, vector<2x10x10x32xf32>
    %67 = vector.extract_strided_slice %66 {offsets = [0, 0, 0, 0], sizes = [2, 8, 8, 32], strides = [1, 1, 1, 1]} : vector<2x10x10x32xf32> to vector<2x8x8x32xf32>
    %68 = vector.shape_cast %67 : vector<2x8x8x32xf32> to vector<128x32xf32>
    %c0_50 = arith.constant 0 : index
    %c0_51 = arith.constant 0 : index
    %69 = vector.load %arg9[%c0_50, %c0_51] : memref<128x288xf32, #tpu.memory_space<vmem>>, vector<128x32xf32>
    tpu.vector_store %arg9[%c0_50, %c0_51], %68 {strides = array<i32>} : memref<128x288xf32, #tpu.memory_space<vmem>>, vector<128x32xf32>,
    %70 = vector.extract_strided_slice %66 {offsets = [0, 0, 1, 0], sizes = [2, 8, 8, 32], strides = [1, 1, 1, 1]} : vector<2x10x10x32xf32> to vector<2x8x8x32xf32>
    %71 = vector.shape_cast %70 : vector<2x8x8x32xf32> to vector<128x32xf32>
    %c0_52 = arith.constant 0 : index
    %c32_53 = arith.constant 32 : index
    %72 = vector.load %arg9[%c0_52, %c32_53] : memref<128x288xf32, #tpu.memory_space<vmem>>, vector<128x32xf32>
    tpu.vector_store %arg9[%c0_52, %c32_53], %71 {strides = array<i32>} : memref<128x288xf32, #tpu.memory_space<vmem>>, vector<128x32xf32>,
    %73 = vector.extract_strided_slice %66 {offsets = [0, 0, 2, 0], sizes = [2, 8, 8, 32], strides = [1, 1, 1, 1]} : vector<2x10x10x32xf32> to vector<2x8x8x32xf32>
    %74 = vector.shape_cast %73 : vector<2x8x8x32xf32> to vector<128x32xf32>
    %c0_54 = arith.constant 0 : index
    %c64_55 = arith.constant 64 : index
    %75 = vector.load %arg9[%c0_54, %c64_55] : memref<128x288xf32, #tpu.memory_space<vmem>>, vector<128x32xf32>
    tpu.vector_store %arg9[%c0_54, %c64_55], %74 {strides = array<i32>} : memref<128x288xf32, #tpu.memory_space<vmem>>, vector<128x32xf32>,
    %76 = vector.extract_strided_slice %66 {offsets = [0, 1, 0, 0], sizes = [2, 8, 8, 32], strides = [1, 1, 1, 1]} : vector<2x10x10x32xf32> to vector<2x8x8x32xf32>
    %77 = vector.shape_cast %76 : vector<2x8x8x32xf32> to vector<128x32xf32>
    %c0_56 = arith.constant 0 : index
    %c96_57 = arith.constant 96 : index
    %78 = vector.load %arg9[%c0_56, %c96_57] : memref<128x288xf32, #tpu.memory_space<vmem>>, vector<128x32xf32>
    tpu.vector_store %arg9[%c0_56, %c96_57], %77 {strides = array<i32>} : memref<128x288xf32, #tpu.memory_space<vmem>>, vector<128x32xf32>,
    %79 = vector.extract_strided_slice %66 {offsets = [0, 1, 1, 0], sizes = [2, 8, 8, 32], strides = [1, 1, 1, 1]} : vector<2x10x10x32xf32> to vector<2x8x8x32xf32>
    %80 = vector.shape_cast %79 : vector<2x8x8x32xf32> to vector<128x32xf32>
    %c0_58 = arith.constant 0 : index
    %c128_59 = arith.constant 128 : index
    %81 = vector.load %arg9[%c0_58, %c128_59] : memref<128x288xf32, #tpu.memory_space<vmem>>, vector<128x32xf32>
    tpu.vector_store %arg9[%c0_58, %c128_59], %80 {strides = array<i32>} : memref<128x288xf32, #tpu.memory_space<vmem>>, vector<128x32xf32>,
    %82 = vector.extract_strided_slice %66 {offsets = [0, 1, 2, 0], sizes = [2, 8, 8, 32], strides = [1, 1, 1, 1]} : vector<2x10x10x32xf32> to vector<2x8x8x32xf32>
    %83 = vector.shape_cast %82 : vector<2x8x8x32xf32> to vector<128x32xf32>
    %c0_60 = arith.constant 0 : index
    %c160_61 = arith.constant 160 : index
    %84 = vector.load %arg9[%c0_60, %c160_61] : memref<128x288xf32, #tpu.memory_space<vmem>>, vector<128x32xf32>
    tpu.vector_store %arg9[%c0_60, %c160_61], %83 {strides = array<i32>} : memref<128x288xf32, #tpu.memory_space<vmem>>, vector<128x32xf32>,
    %85 = vector.extract_strided_slice %66 {offsets = [0, 2, 0, 0], sizes = [2, 8, 8, 32], strides = [1, 1, 1, 1]} : vector<2x10x10x32xf32> to vector<2x8x8x32xf32>
    %86 = vector.shape_cast %85 : vector<2x8x8x32xf32> to vector<128x32xf32>
    %c0_62 = arith.constant 0 : index
    %c192_63 = arith.constant 192 : index
    %87 = vector.load %arg9[%c0_62, %c192_63] : memref<128x288xf32, #tpu.memory_space<vmem>>, vector<128x32xf32>
    tpu.vector_store %arg9[%c0_62, %c192_63], %86 {strides = array<i32>} : memref<128x288xf32, #tpu.memory_space<vmem>>, vector<128x32xf32>,
    %88 = vector.extract_strided_slice %66 {offsets = [0, 2, 1, 0], sizes = [2, 8, 8, 32], strides = [1, 1, 1, 1]} : vector<2x10x10x32xf32> to vector<2x8x8x32xf32>
    %89 = vector.shape_cast %88 : vector<2x8x8x32xf32> to vector<128x32xf32>
    %c0_64 = arith.constant 0 : index
    %c224_65 = arith.constant 224 : index
    %90 = vector.load %arg9[%c0_64, %c224_65] : memref<128x288xf32, #tpu.memory_space<vmem>>, vector<128x32xf32>
    tpu.vector_store %arg9[%c0_64, %c224_65], %89 {strides = array<i32>} : memref<128x288xf32, #tpu.memory_space<vmem>>, vector<128x32xf32>,
    %91 = vector.extract_strided_slice %66 {offsets = [0, 2, 2, 0], sizes = [2, 8, 8, 32], strides = [1, 1, 1, 1]} : vector<2x10x10x32xf32> to vector<2x8x8x32xf32>
    %92 = vector.shape_cast %91 : vector<2x8x8x32xf32> to vector<128x32xf32>
    %c0_66 = arith.constant 0 : index
    %c256_67 = arith.constant 256 : index
    %93 = vector.load %arg9[%c0_66, %c256_67] : memref<128x288xf32, #tpu.memory_space<vmem>>, vector<128x32xf32>
    tpu.vector_store %arg9[%c0_66, %c256_67], %92 {strides = array<i32>} : memref<128x288xf32, #tpu.memory_space<vmem>>, vector<128x32xf32>,
    %c0_68 = arith.constant 0 : index
    %c0_69 = arith.constant 0 : index
    %94 = vector.load %arg9[%c0_68, %c0_69] : memref<128x288xf32, #tpu.memory_space<vmem>>, vector<128x288xf32>
    %cst_70 = arith.constant dense<0.000000e+00> : vector<128x32xf32>
    %95 = tpu.matmul %94, %65, %cst_70 {dimension_numbers = #tpu.dot_dimension_numbers<[1], [0], [0], [1], [0, 0, 1, 1], [], []>} : vector<128x288xf32>, vector<288x32xf32>, vector<128x32xf32> -> vector<128x32xf32>
    %c0_71 = arith.constant 0 : index
    %c0_72 = arith.constant 0 : index
    %96 = vector.load %arg5[%c0_71, %c0_72] : memref<1x32xf32, #tpu.memory_space<vmem>>, vector<1x32xf32>
    %c0_73 = arith.constant 0 : index
    %c0_74 = arith.constant 0 : index
    %97 = vector.load %arg6[%c0_73, %c0_74] : memref<1x32xf32, #tpu.memory_space<vmem>>, vector<1x32xf32>
    %cst_75 = arith.constant dense<0.000000e+00> : vector<32xf32>
    %98 = vector.multi_reduction <add>, %95, %cst_75 [0] : vector<128x32xf32> to vector<32xf32>
    %99 = vector.shape_cast %98 : vector<32xf32> to vector<1x32xf32>
    %100 = arith.mulf %95, %95 : vector<128x32xf32>
    %cst_76 = arith.constant dense<0.000000e+00> : vector<32xf32>
    %101 = vector.multi_reduction <add>, %100, %cst_76 [0] : vector<128x32xf32> to vector<32xf32>
    %102 = vector.shape_cast %101 : vector<32xf32> to vector<1x32xf32>
    %cst_77 = arith.constant 7.812500e-03 : f32
    %103 = vector.broadcast %cst_77 : f32 to vector<1x32xf32>
    %104 = arith.mulf %99, %103 : vector<1x32xf32>
    %cst_78 = arith.constant 7.812500e-03 : f32
    %105 = vector.broadcast %cst_78 : f32 to vector<1x32xf32>
    %106 = arith.mulf %102, %105 : vector<1x32xf32>
    %107 = arith.mulf %104, %104 : vector<1x32xf32>
    %108 = arith.subf %106, %107 : vector<1x32xf32>
    %cst_79 = arith.constant 9.99999974E-6 : f32
    %109 = vector.broadcast %cst_79 : f32 to vector<1x32xf32>
    %110 = arith.addf %108, %109 : vector<1x32xf32>
    %111 = math.rsqrt %110 : vector<1x32xf32>
    %112 = arith.mulf %96, %111 : vector<1x32xf32>
    %113 = arith.mulf %104, %112 : vector<1x32xf32>
    %114 = arith.subf %97, %113 : vector<1x32xf32>
    %115 = vector.broadcast %112 : vector<1x32xf32> to vector<128x32xf32>
    %116 = arith.mulf %95, %115 : vector<128x32xf32>
    %117 = vector.broadcast %114 : vector<1x32xf32> to vector<128x32xf32>
    %118 = arith.addf %116, %117 : vector<128x32xf32>
    %c0_80 = arith.constant 0 : index
    %c0_81 = arith.constant 0 : index
    %c0_82 = arith.constant 0 : index
    %c0_83 = arith.constant 0 : index
    %119 = vector.load %arg0[%c0_80, %c0_81, %c0_82, %c0_83] : memref<2x8x8x32xf32, #tpu.memory_space<vmem>>, vector<2x8x8x32xf32>
    %120 = vector.shape_cast %119 : vector<2x8x8x32xf32> to vector<128x32xf32>
    %121 = arith.addf %118, %120 : vector<128x32xf32>
    %122 = vector.shape_cast %121 : vector<128x32xf32> to vector<2x64x32xf32>
    %c0_84 = arith.constant 0 : index
    %c0_85 = arith.constant 0 : index
    %c0_86 = arith.constant 0 : index
    %123 = vector.load %arg7[%c0_84, %c0_85, %c0_86] : memref<2x64x32xf32, #tpu.memory_space<vmem>>, vector<2x64x32xf32>
    tpu.vector_store %arg7[%c0_84, %c0_85, %c0_86], %122 {strides = array<i32>} : memref<2x64x32xf32, #tpu.memory_space<vmem>>, vector<2x64x32xf32>,
    return
  }
}

</mosaic_0001>

<llo_original>
// kernel: resnet_block.1
$region0: #{resnet_block.1}
  #allocation0 [shape = 'u32[]', space=smem, size = 0x4, offset = 0x4, fixed_abs, tag = 'smem constant byte address 0x4 - core index']
  #allocation1 [shape = 'u32[144,128]{1,0:T(1,128)}', space=vmem, size = 0x12000, scoped, tag = 'internal scratch']
  #allocation2 [shape = 'f32[2,10,10,32]{3,2,1,0:T(8,128)}', space=vmem, size = 0x28000, scoped, tag = 'scratch operand']
  #allocation3 [shape = 'f32[128,288]{1,0:T(8,128)}', space=vmem, size = 0x30000, scoped, tag = 'scratch operand']
  %s0 = inlined_call_operand.vmem [shape: f32[2,8,8,32], index: 0, kind: input, shape index: {}]
  %s1 = inlined_call_operand.hbm [shape: f32[288,32], index: 1, kind: input, shape index: {}]
  %s2 = inlined_call_operand.vmem [shape: f32[1,32], index: 2, kind: input, shape index: {}]
  %s3 = inlined_call_operand.vmem [shape: f32[1,32], index: 3, kind: input, shape index: {}]
  %s4 = inlined_call_operand.hbm [shape: f32[288,32], index: 4, kind: input, shape index: {}]
  %s5 = inlined_call_operand.vmem [shape: f32[1,32], index: 5, kind: input, shape index: {}]
  %s6 = inlined_call_operand.vmem [shape: f32[1,32], index: 6, kind: input, shape index: {}]
  %s7 = inlined_call_operand.vmem [shape: f32[2,64,32], index: 7, kind: output, shape index: {}]
  %s8 = sld [smem:[#allocation0]]
  $region46: #{resnet_block.1} parent=0
    _
  %s10 = ssub.s32 1, %s8
  %s11 = scalar_select 0, %s10, %s8
  $region1: #{resnet_block.1} parent=0
    #allocation4 [shape = 'u8[147456]{0}', space=vmem, size = 0x24000, scoped, tag = 'input window, operand 1, single buffered']
    #allocation5 [shape = 's32[1]{0}', space=sflag, size = 0x4, scoped, tag = 'scoped memory for resnet_block.1']
    #allocation6 [shape = 'u8[147456]{0}', space=vmem, size = 0x24000, scoped, tag = 'input window, operand 4, single buffered']
    #allocation7 [shape = 's32[1]{0}', space=sflag, size = 0x4, scoped, tag = 'scoped memory for resnet_block.1']
    %12 = vsyncpa [#allocation5], 0
    %13 = vsyncpa [#allocation7], 0
    // Predicated region
    $region2: #{resnet_block.1} parent=1 // pred_check
      _
    $region3: #{resnet_block.1} parent=1 // pred_check_branch
      %15 = sbr.rel (0) target = $region5
    $region4: #{resnet_block.1} parent=1 // pred_region
      _
    $region5: #{resnet_block.1} parent=1 // pred_fallthru
      _
    // Predicated region
    $region6: #{resnet_block.1} parent=1 // pred_check
      _
    $region7: #{resnet_block.1} parent=1 // pred_check_branch
      %17 = sbr.rel (0) target = $region9
    $region8: #{resnet_block.1} parent=1 // pred_region
      %s19 = ssub.s32 4608, 4608
      %20 = vsyncadd [#allocation5], %s19
      %s21 = sshll.u32 [#allocation4], 4
      %s22 = int_to_ptr.vmem [resolvable:$true] %s21
      %27 = dma.hbm_to_vmem [thread:$0]  %s1, 4608, %s22, [#allocation5], 128, 128, 8
    $region9: #{resnet_block.1} parent=1 // pred_fallthru
      _
    // Predicated region
    $region10: #{resnet_block.1} parent=1 // pred_check
      _
    $region11: #{resnet_block.1} parent=1 // pred_check_branch
      %29 = sbr.rel (0) target = $region13
    $region12: #{resnet_block.1} parent=1 // pred_region
      _
    $region13: #{resnet_block.1} parent=1 // pred_fallthru
      _
    // Predicated region
    $region14: #{resnet_block.1} parent=1 // pred_check
      _
    $region15: #{resnet_block.1} parent=1 // pred_check_branch
      %31 = sbr.rel (0) target = $region17
    $region16: #{resnet_block.1} parent=1 // pred_region
      _
    $region17: #{resnet_block.1} parent=1 // pred_fallthru
      _
    // Predicated region
    $region18: #{resnet_block.1} parent=1 // pred_check
      _
    $region19: #{resnet_block.1} parent=1 // pred_check_branch
      %33 = sbr.rel (0) target = $region21
    $region20: #{resnet_block.1} parent=1 // pred_region
      %s35 = ssub.s32 4608, 4608
      %36 = vsyncadd [#allocation7], %s35
      %s37 = sshll.u32 [#allocation6], 4
      %s38 = int_to_ptr.vmem [resolvable:$true] %s37
      %43 = dma.hbm_to_vmem [thread:$0]  %s4, 4608, %s38, [#allocation7], 128, 128, 8
    $region21: #{resnet_block.1} parent=1 // pred_fallthru
      _
    // Predicated region
    $region22: #{resnet_block.1} parent=1 // pred_check
      _
    $region23: #{resnet_block.1} parent=1 // pred_check_branch
      %45 = sbr.rel (0) target = $region25
    $region24: #{resnet_block.1} parent=1 // pred_region
      _
    $region25: #{resnet_block.1} parent=1 // pred_fallthru
      _
    // Predicated region
    $region26: #{resnet_block.1} parent=1 // pred_check
      _
    $region27: #{resnet_block.1} parent=1 // pred_check_branch
      %47 = sbr.rel (0) target = $region29
    $region28: #{resnet_block.1} parent=1 // pred_region
      _
    $region29: #{resnet_block.1} parent=1 // pred_fallthru
      _
    // Predicated region
    $region30: #{resnet_block.1} parent=1 // pred_check
      _
    $region31: #{resnet_block.1} parent=1 // pred_check_branch
      %49 = sbr.rel (0) target = $region33
    $region32: #{resnet_block.1} parent=1 // pred_region
      %50 = dma.done [#allocation5], 4608
    $region33: #{resnet_block.1} parent=1 // pred_fallthru
      _
    // Predicated region
    $region34: #{resnet_block.1} parent=1 // pred_check
      _
    $region35: #{resnet_block.1} parent=1 // pred_check_branch
      %52 = sbr.rel (0) target = $region37
    $region36: #{resnet_block.1} parent=1 // pred_region
      %53 = dma.done [#allocation7], 4608
    $region37: #{resnet_block.1} parent=1 // pred_fallthru
      _
    %vm54 = vcmask 261120
    %55 = vst.msk [vmem:[#allocation2] sm:$0xff] %vm54, 0.0
    %vm56 = vcmask 254976
    %57 = vst.msk [vmem:[#allocation2 + $0x8] sm:$0x3] %vm56, 0.0
    %58 = vst.msk [vmem:[#allocation2 + $0x10] sm:$0xff] %vm54, 0.0
    %59 = vst.msk [vmem:[#allocation2 + $0x18] sm:$0x3] %vm56, 0.0
    %60 = vst.msk [vmem:[#allocation2 + $0x20] sm:$0xff] %vm54, 0.0
    %61 = vst.msk [vmem:[#allocation2 + $0x28] sm:$0x3] %vm56, 0.0
    %62 = vst.msk [vmem:[#allocation2 + $0x30] sm:$0xff] %vm54, 0.0
    %63 = vst.msk [vmem:[#allocation2 + $0x38] sm:$0x3] %vm56, 0.0
    %64 = vst.msk [vmem:[#allocation2 + $0x40] sm:$0xff] %vm54, 0.0
    %65 = vst.msk [vmem:[#allocation2 + $0x48] sm:$0x3] %vm56, 0.0
    %66 = vst.msk [vmem:[#allocation2 + $0x50] sm:$0xff] %vm54, 0.0
    %67 = vst.msk [vmem:[#allocation2 + $0x58] sm:$0x3] %vm56, 0.0
    %68 = vst.msk [vmem:[#allocation2 + $0x60] sm:$0xff] %vm54, 0.0
    %69 = vst.msk [vmem:[#allocation2 + $0x68] sm:$0x3] %vm56, 0.0
    %70 = vst.msk [vmem:[#allocation2 + $0x70] sm:$0xff] %vm54, 0.0
    %71 = vst.msk [vmem:[#allocation2 + $0x78] sm:$0x3] %vm56, 0.0
    %72 = vst.msk [vmem:[#allocation2 + $0x80] sm:$0xff] %vm54, 0.0
    %73 = vst.msk [vmem:[#allocation2 + $0x88] sm:$0x3] %vm56, 0.0
    %74 = vst.msk [vmem:[#allocation2 + $0x90] sm:$0xff] %vm54, 0.0
    %75 = vst.msk [vmem:[#allocation2 + $0x98] sm:$0x3] %vm56, 0.0
    %76 = vst.msk [vmem:[#allocation2 + $0xa0] sm:$0xff] %vm54, 0.0
    %77 = vst.msk [vmem:[#allocation2 + $0xa8] sm:$0x3] %vm56, 0.0
    %78 = vst.msk [vmem:[#allocation2 + $0xb0] sm:$0xff] %vm54, 0.0
    %79 = vst.msk [vmem:[#allocation2 + $0xb8] sm:$0x3] %vm56, 0.0
    %80 = vst.msk [vmem:[#allocation2 + $0xc0] sm:$0xff] %vm54, 0.0
    %81 = vst.msk [vmem:[#allocation2 + $0xc8] sm:$0x3] %vm56, 0.0
    %82 = vst.msk [vmem:[#allocation2 + $0xd0] sm:$0xff] %vm54, 0.0
    %83 = vst.msk [vmem:[#allocation2 + $0xd8] sm:$0x3] %vm56, 0.0
    %84 = vst.msk [vmem:[#allocation2 + $0xe0] sm:$0xff] %vm54, 0.0
    %85 = vst.msk [vmem:[#allocation2 + $0xe8] sm:$0x3] %vm56, 0.0
    %86 = vst.msk [vmem:[#allocation2 + $0xf0] sm:$0xff] %vm54, 0.0
    %87 = vst.msk [vmem:[#allocation2 + $0xf8] sm:$0x3] %vm56, 0.0
    %88 = vst.msk [vmem:[#allocation2 + $0x100] sm:$0xff] %vm54, 0.0
    %89 = vst.msk [vmem:[#allocation2 + $0x108] sm:$0x3] %vm56, 0.0
    %90 = vst.msk [vmem:[#allocation2 + $0x110] sm:$0xff] %vm54, 0.0
    %91 = vst.msk [vmem:[#allocation2 + $0x118] sm:$0x3] %vm56, 0.0
    %92 = vst.msk [vmem:[#allocation2 + $0x120] sm:$0xff] %vm54, 0.0
    %93 = vst.msk [vmem:[#allocation2 + $0x128] sm:$0x3] %vm56, 0.0
    %94 = vst.msk [vmem:[#allocation2 + $0x130] sm:$0xff] %vm54, 0.0
    %95 = vst.msk [vmem:[#allocation2 + $0x138] sm:$0x3] %vm56, 0.0
    %v96 = vld [vmem:[%s0] sm:$0xff]
    %v97 = vld [vmem:[%s0 + $0x8] sm:$0xff]
    %v98 = vld [vmem:[%s0 + $0x10] sm:$0xff]
    %v99 = vld [vmem:[%s0 + $0x18] sm:$0xff]
    %v100 = vld [vmem:[%s0 + $0x20] sm:$0xff]
    %v101 = vld [vmem:[%s0 + $0x28] sm:$0xff]
    %v102 = vld [vmem:[%s0 + $0x30] sm:$0xff]
    %v103 = vld [vmem:[%s0 + $0x38] sm:$0xff]
    %v104 = vld [vmem:[%s0 + $0x40] sm:$0xff]
    %v105 = vld [vmem:[%s0 + $0x48] sm:$0xff]
    %v106 = vld [vmem:[%s0 + $0x50] sm:$0xff]
    %v107 = vld [vmem:[%s0 + $0x58] sm:$0xff]
    %v108 = vld [vmem:[%s0 + $0x60] sm:$0xff]
    %v109 = vld [vmem:[%s0 + $0x68] sm:$0xff]
    %v110 = vld [vmem:[%s0 + $0x70] sm:$0xff]
    %v111 = vld [vmem:[%s0 + $0x78] sm:$0xff]
    %s112 = scalar_lea.vmem [#allocation2], 16
    %113 = vst.msk [vmem:[%s112 + $0x1] sm:$0xff] %vm54, %v96
    %114 = vst.msk [vmem:[%s112 + $0x11] sm:$0xff] %vm54, %v97
    %115 = vst.msk [vmem:[%s112 + $0x21] sm:$0xff] %vm54, %v98
    %116 = vst.msk [vmem:[%s112 + $0x31] sm:$0xff] %vm54, %v99
    %117 = vst.msk [vmem:[%s112 + $0x41] sm:$0xff] %vm54, %v100
    %118 = vst.msk [vmem:[%s112 + $0x51] sm:$0xff] %vm54, %v101
    %119 = vst.msk [vmem:[%s112 + $0x61] sm:$0xff] %vm54, %v102
    %120 = vst.msk [vmem:[%s112 + $0x71] sm:$0xff] %vm54, %v103
    %121 = vst.msk [vmem:[%s112 + $0xa1] sm:$0xff] %vm54, %v104
    %122 = vst.msk [vmem:[%s112 + $0xb1] sm:$0xff] %vm54, %v105
    %123 = vst.msk [vmem:[%s112 + $0xc1] sm:$0xff] %vm54, %v106
    %124 = vst.msk [vmem:[%s112 + $0xd1] sm:$0xff] %vm54, %v107
    %125 = vst.msk [vmem:[%s112 + $0xe1] sm:$0xff] %vm54, %v108
    %126 = vst.msk [vmem:[%s112 + $0xf1] sm:$0xff] %vm54, %v109
    %127 = vst.msk [vmem:[%s112 + $0x101] sm:$0xff] %vm54, %v110
    %128 = vst.msk [vmem:[%s112 + $0x111] sm:$0xff] %vm54, %v111
    %v129 = vld [vmem:[#allocation4] sm:$0xff]
    %v130 = vld [vmem:[#allocation4 + $0x8] sm:$0xff]
    %v131 = vld [vmem:[#allocation4 + $0x10] sm:$0xff]
    %v132 = vld [vmem:[#allocation4 + $0x18] sm:$0xff]
    %v133 = vld [vmem:[#allocation4 + $0x20] sm:$0xff]
    %v134 = vld [vmem:[#allocation4 + $0x28] sm:$0xff]
    %v135 = vld [vmem:[#allocation4 + $0x30] sm:$0xff]
    %v136 = vld [vmem:[#allocation4 + $0x38] sm:$0xff]
    %v137 = vld [vmem:[#allocation4 + $0x40] sm:$0xff]
    %v138 = vld [vmem:[#allocation4 + $0x48] sm:$0xff]
    %v139 = vld [vmem:[#allocation4 + $0x50] sm:$0xff]
    %v140 = vld [vmem:[#allocation4 + $0x58] sm:$0xff]
    %v141 = vld [vmem:[#allocation4 + $0x60] sm:$0xff]
    %v142 = vld [vmem:[#allocation4 + $0x68] sm:$0xff]
    %v143 = vld [vmem:[#allocation4 + $0x70] sm:$0xff]
    %v144 = vld [vmem:[#allocation4 + $0x78] sm:$0xff]
    %v145 = vld [vmem:[#allocation4 + $0x80] sm:$0xff]
    %v146 = vld [vmem:[#allocation4 + $0x88] sm:$0xff]
    %v147 = vld [vmem:[#allocation4 + $0x90] sm:$0xff]
    %v148 = vld [vmem:[#allocation4 + $0x98] sm:$0xff]
    %v149 = vld [vmem:[#allocation4 + $0xa0] sm:$0xff]
    %v150 = vld [vmem:[#allocation4 + $0xa8] sm:$0xff]
    %v151 = vld [vmem:[#allocation4 + $0xb0] sm:$0xff]
    %v152 = vld [vmem:[#allocation4 + $0xb8] sm:$0xff]
    %v153 = vld [vmem:[#allocation4 + $0xc0] sm:$0xff]
    %v154 = vld [vmem:[#allocation4 + $0xc8] sm:$0xff]
    %v155 = vld [vmem:[#allocation4 + $0xd0] sm:$0xff]
    %v156 = vld [vmem:[#allocation4 + $0xd8] sm:$0xff]
    %v157 = vld [vmem:[#allocation4 + $0xe0] sm:$0xff]
    %v158 = vld [vmem:[#allocation4 + $0xe8] sm:$0xff]
    %v159 = vld [vmem:[#allocation4 + $0xf0] sm:$0xff]
    %v160 = vld [vmem:[#allocation4 + $0xf8] sm:$0xff]
    %v161 = vld [vmem:[#allocation4 + $0x100] sm:$0xff]
    %v162 = vld [vmem:[#allocation4 + $0x108] sm:$0xff]
    %v163 = vld [vmem:[#allocation4 + $0x110] sm:$0xff]
    %v164 = vld [vmem:[#allocation4 + $0x118] sm:$0xff]
    %v165 = vld [vmem:[#allocation2] sm:$0xff]
    %v166 = vld [vmem:[#allocation2 + $0x8] sm:$0x3]
    %v167 = vld [vmem:[#allocation2 + $0x10] sm:$0xff]
    %v168 = vld [vmem:[#allocation2 + $0x18] sm:$0x3]
    %v169 = vld [vmem:[#allocation2 + $0x20] sm:$0xff]
    %v170 = vld [vmem:[#allocation2 + $0x28] sm:$0x3]
    %v171 = vld [vmem:[#allocation2 + $0x30] sm:$0xff]
    %v172 = vld [vmem:[#allocation2 + $0x38] sm:$0x3]
    %v173 = vld [vmem:[#allocation2 + $0x40] sm:$0xff]
    %v174 = vld [vmem:[#allocation2 + $0x48] sm:$0x3]
    %v175 = vld [vmem:[#allocation2 + $0x50] sm:$0xff]
    %v176 = vld [vmem:[#allocation2 + $0x58] sm:$0x3]
    %v177 = vld [vmem:[#allocation2 + $0x60] sm:$0xff]
    %v178 = vld [vmem:[#allocation2 + $0x68] sm:$0x3]
    %v179 = vld [vmem:[#allocation2 + $0x70] sm:$0xff]
    %v180 = vld [vmem:[#allocation2 + $0x78] sm:$0x3]
    %v181 = vld [vmem:[#allocation2 + $0x80] sm:$0xff]
    %v182 = vld [vmem:[#allocation2 + $0x88] sm:$0x3]
    %v183 = vld [vmem:[#allocation2 + $0x90] sm:$0xff]
    %v184 = vld [vmem:[#allocation2 + $0x98] sm:$0x3]
    %v185 = vld [vmem:[#allocation2 + $0xa0] sm:$0xff]
    %v186 = vld [vmem:[#allocation2 + $0xa8] sm:$0x3]
    %v187 = vld [vmem:[#allocation2 + $0xb0] sm:$0xff]
    %v188 = vld [vmem:[#allocation2 + $0xb8] sm:$0x3]
    %v189 = vld [vmem:[#allocation2 + $0xc0] sm:$0xff]
    %v190 = vld [vmem:[#allocation2 + $0xc8] sm:$0x3]
    %v191 = vld [vmem:[#allocation2 + $0xd0] sm:$0xff]
    %v192 = vld [vmem:[#allocation2 + $0xd8] sm:$0x3]
    %v193 = vld [vmem:[#allocation2 + $0xe0] sm:$0xff]
    %v194 = vld [vmem:[#allocation2 + $0xe8] sm:$0x3]
    %v195 = vld [vmem:[#allocation2 + $0xf0] sm:$0xff]
    %v196 = vld [vmem:[#allocation2 + $0xf8] sm:$0x3]
    %v197 = vld [vmem:[#allocation2 + $0x100] sm:$0xff]
    %v198 = vld [vmem:[#allocation2 + $0x108] sm:$0x3]
    %v199 = vld [vmem:[#allocation2 + $0x110] sm:$0xff]
    %v200 = vld [vmem:[#allocation2 + $0x118] sm:$0x3]
    %v201 = vld [vmem:[#allocation2 + $0x120] sm:$0xff]
    %v202 = vld [vmem:[#allocation2 + $0x128] sm:$0x3]
    %v203 = vld [vmem:[#allocation2 + $0x130] sm:$0xff]
    %v204 = vld [vmem:[#allocation2 + $0x138] sm:$0x3]
    %205 = vst.msk [vmem:[#allocation3] sm:$0xff] %vm54, %v165
    %206 = vst.msk [vmem:[#allocation3 + $0x18] sm:$0xff] %vm54, %v167
    %207 = vst.msk [vmem:[#allocation3 + $0x30] sm:$0xff] %vm54, %v169
    %208 = vst.msk [vmem:[#allocation3 + $0x48] sm:$0xff] %vm54, %v171
    %209 = vst.msk [vmem:[#allocation3 + $0x60] sm:$0xff] %vm54, %v173
    %210 = vst.msk [vmem:[#allocation3 + $0x78] sm:$0xff] %vm54, %v175
    %211 = vst.msk [vmem:[#allocation3 + $0x90] sm:$0xff] %vm54, %v177
    %212 = vst.msk [vmem:[#allocation3 + $0xa8] sm:$0xff] %vm54, %v179
    %213 = vst.msk [vmem:[#allocation3 + $0xc0] sm:$0xff] %vm54, %v185
    %214 = vst.msk [vmem:[#allocation3 + $0xd8] sm:$0xff] %vm54, %v187
    %215 = vst.msk [vmem:[#allocation3 + $0xf0] sm:$0xff] %vm54, %v189
    %216 = vst.msk [vmem:[#allocation3 + $0x108] sm:$0xff] %vm54, %v191
    %217 = vst.msk [vmem:[#allocation3 + $0x120] sm:$0xff] %vm54, %v193
    %218 = vst.msk [vmem:[#allocation3 + $0x138] sm:$0xff] %vm54, %v195
    %219 = vst.msk [vmem:[#allocation3 + $0x150] sm:$0xff] %vm54, %v197
    %220 = vst.msk [vmem:[#allocation3 + $0x168] sm:$0xff] %vm54, %v199
    %vm253 = vcmask 1046528
    %v254 = vrot.slane %v165, 1
    %v255 = vrot.slane %v166, 1
    %v256 = vsel %vm253, %v254, %v255
    %v257 = vrot.slane %v167, 1
    %v258 = vrot.slane %v168, 1
    %v259 = vsel %vm253, %v257, %v258
    %v260 = vrot.slane %v169, 1
    %v261 = vrot.slane %v170, 1
    %v262 = vsel %vm253, %v260, %v261
    %v263 = vrot.slane %v171, 1
    %v264 = vrot.slane %v172, 1
    %v265 = vsel %vm253, %v263, %v264
    %v266 = vrot.slane %v173, 1
    %v267 = vrot.slane %v174, 1
    %v268 = vsel %vm253, %v266, %v267
    %v269 = vrot.slane %v175, 1
    %v270 = vrot.slane %v176, 1
    %v271 = vsel %vm253, %v269, %v270
    %v272 = vrot.slane %v177, 1
    %v273 = vrot.slane %v178, 1
    %v274 = vsel %vm253, %v272, %v273
    %v275 = vrot.slane %v179, 1
    %v276 = vrot.slane %v180, 1
    %v277 = vsel %vm253, %v275, %v276
    %v278 = vrot.slane %v185, 1
    %v279 = vrot.slane %v186, 1
    %v280 = vsel %vm253, %v278, %v279
    %v281 = vrot.slane %v187, 1
    %v282 = vrot.slane %v188, 1
    %v283 = vsel %vm253, %v281, %v282
    %v284 = vrot.slane %v189, 1
    %v285 = vrot.slane %v190, 1
    %v286 = vsel %vm253, %v284, %v285
    %v287 = vrot.slane %v191, 1
    %v288 = vrot.slane %v192, 1
    %v289 = vsel %vm253, %v287, %v288
    %v290 = vrot.slane %v193, 1
    %v291 = vrot.slane %v194, 1
    %v292 = vsel %vm253, %v290, %v291
    %v293 = vrot.slane %v195, 1
    %v294 = vrot.slane %v196, 1
    %v295 = vsel %vm253, %v293, %v294
    %v296 = vrot.slane %v197, 1
    %v297 = vrot.slane %v198, 1
    %v298 = vsel %vm253, %v296, %v297
    %v299 = vrot.slane %v199, 1
    %v300 = vrot.slane %v200, 1
    %v301 = vsel %vm253, %v299, %v300
    %302 = vrot.lane.b32.xlu0 %v256, 32
    %v303 = vpop.permute.xlu0 %302
    %304 = vrot.lane.b32.xlu0 %v259, 32
    %v305 = vpop.permute.xlu0 %304
    %306 = vrot.lane.b32.xlu0 %v262, 32
    %v307 = vpop.permute.xlu0 %306
    %308 = vrot.lane.b32.xlu0 %v265, 32
    %v309 = vpop.permute.xlu0 %308
    %310 = vrot.lane.b32.xlu0 %v268, 32
    %v311 = vpop.permute.xlu0 %310
    %312 = vrot.lane.b32.xlu0 %v271, 32
    %v313 = vpop.permute.xlu0 %312
    %314 = vrot.lane.b32.xlu0 %v274, 32
    %v315 = vpop.permute.xlu0 %314
    %316 = vrot.lane.b32.xlu0 %v277, 32
    %v317 = vpop.permute.xlu0 %316
    %318 = vrot.lane.b32.xlu0 %v280, 32
    %v319 = vpop.permute.xlu0 %318
    %320 = vrot.lane.b32.xlu0 %v283, 32
    %v321 = vpop.permute.xlu0 %320
    %322 = vrot.lane.b32.xlu0 %v286, 32
    %v323 = vpop.permute.xlu0 %322
    %324 = vrot.lane.b32.xlu0 %v289, 32
    %v325 = vpop.permute.xlu0 %324
    %326 = vrot.lane.b32.xlu0 %v292, 32
    %v327 = vpop.permute.xlu0 %326
    %328 = vrot.lane.b32.xlu0 %v295, 32
    %v329 = vpop.permute.xlu0 %328
    %330 = vrot.lane.b32.xlu0 %v298, 32
    %v331 = vpop.permute.xlu0 %330
    %332 = vrot.lane.b32.xlu0 %v301, 32
    %v333 = vpop.permute.xlu0 %332
    %vm350 = vcmask 523520
    %351 = vst.msk [vmem:[#allocation3] sm:$0xff] %vm350, %v303
    %352 = vst.msk [vmem:[#allocation3 + $0x18] sm:$0xff] %vm350, %v305
    %353 = vst.msk [vmem:[#allocation3 + $0x30] sm:$0xff] %vm350, %v307
    %354 = vst.msk [vmem:[#allocation3 + $0x48] sm:$0xff] %vm350, %v309
    %355 = vst.msk [vmem:[#allocation3 + $0x60] sm:$0xff] %vm350, %v311
    %356 = vst.msk [vmem:[#allocation3 + $0x78] sm:$0xff] %vm350, %v313
    %357 = vst.msk [vmem:[#allocation3 + $0x90] sm:$0xff] %vm350, %v315
    %358 = vst.msk [vmem:[#allocation3 + $0xa8] sm:$0xff] %vm350, %v317
    %359 = vst.msk [vmem:[#allocation3 + $0xc0] sm:$0xff] %vm350, %v319
    %360 = vst.msk [vmem:[#allocation3 + $0xd8] sm:$0xff] %vm350, %v321
    %361 = vst.msk [vmem:[#allocation3 + $0xf0] sm:$0xff] %vm350, %v323
    %362 = vst.msk [vmem:[#allocation3 + $0x108] sm:$0xff] %vm350, %v325
    %363 = vst.msk [vmem:[#allocation3 + $0x120] sm:$0xff] %vm350, %v327
    %364 = vst.msk [vmem:[#allocation3 + $0x138] sm:$0xff] %vm350, %v329
    %365 = vst.msk [vmem:[#allocation3 + $0x150] sm:$0xff] %vm350, %v331
    %366 = vst.msk [vmem:[#allocation3 + $0x168] sm:$0xff] %vm350, %v333
    %vm367 = vcmask 1045504
    %v368 = vrot.slane %v165, 2
    %v369 = vrot.slane %v166, 2
    %v370 = vsel %vm367, %v368, %v369
    %v371 = vrot.slane %v167, 2
    %v372 = vrot.slane %v168, 2
    %v373 = vsel %vm367, %v371, %v372
    %v374 = vrot.slane %v169, 2
    %v375 = vrot.slane %v170, 2
    %v376 = vsel %vm367, %v374, %v375
    %v377 = vrot.slane %v171, 2
    %v378 = vrot.slane %v172, 2
    %v379 = vsel %vm367, %v377, %v378
    %v380 = vrot.slane %v173, 2
    %v381 = vrot.slane %v174, 2
    %v382 = vsel %vm367, %v380, %v381
    %v383 = vrot.slane %v175, 2
    %v384 = vrot.slane %v176, 2
    %v385 = vsel %vm367, %v383, %v384
    %v386 = vrot.slane %v177, 2
    %v387 = vrot.slane %v178, 2
    %v388 = vsel %vm367, %v386, %v387
    %v389 = vrot.slane %v179, 2
    %v390 = vrot.slane %v180, 2
    %v391 = vsel %vm367, %v389, %v390
    %v392 = vrot.slane %v185, 2
    %v393 = vrot.slane %v186, 2
    %v394 = vsel %vm367, %v392, %v393
    %v395 = vrot.slane %v187, 2
    %v396 = vrot.slane %v188, 2
    %v397 = vsel %vm367, %v395, %v396
    %v398 = vrot.slane %v189, 2
    %v399 = vrot.slane %v190, 2
    %v400 = vsel %vm367, %v398, %v399
    %v401 = vrot.slane %v191, 2
    %v402 = vrot.slane %v192, 2
    %v403 = vsel %vm367, %v401, %v402
    %v404 = vrot.slane %v193, 2
    %v405 = vrot.slane %v194, 2
    %v406 = vsel %vm367, %v404, %v405
    %v407 = vrot.slane %v195, 2
    %v408 = vrot.slane %v196, 2
    %v409 = vsel %vm367, %v407, %v408
    %v410 = vrot.slane %v197, 2
    %v411 = vrot.slane %v198, 2
    %v412 = vsel %vm367, %v410, %v411
    %v413 = vrot.slane %v199, 2
    %v414 = vrot.slane %v200, 2
    %v415 = vsel %vm367, %v413, %v414
    %416 = vrot.lane.b32.xlu0 %v370, 64
    %v417 = vpop.permute.xlu0 %416
    %418 = vrot.lane.b32.xlu0 %v373, 64
    %v419 = vpop.permute.xlu0 %418
    %420 = vrot.lane.b32.xlu0 %v376, 64
    %v421 = vpop.permute.xlu0 %420
    %422 = vrot.lane.b32.xlu0 %v379, 64
    %v423 = vpop.permute.xlu0 %422
    %424 = vrot.lane.b32.xlu0 %v382, 64
    %v425 = vpop.permute.xlu0 %424
    %426 = vrot.lane.b32.xlu0 %v385, 64
    %v427 = vpop.permute.xlu0 %426
    %428 = vrot.lane.b32.xlu0 %v388, 64
    %v429 = vpop.permute.xlu0 %428
    %430 = vrot.lane.b32.xlu0 %v391, 64
    %v431 = vpop.permute.xlu0 %430
    %432 = vrot.lane.b32.xlu0 %v394, 64
    %v433 = vpop.permute.xlu0 %432
    %434 = vrot.lane.b32.xlu0 %v397, 64
    %v435 = vpop.permute.xlu0 %434
    %436 = vrot.lane.b32.xlu0 %v400, 64
    %v437 = vpop.permute.xlu0 %436
    %438 = vrot.lane.b32.xlu0 %v403, 64
    %v439 = vpop.permute.xlu0 %438
    %440 = vrot.lane.b32.xlu0 %v406, 64
    %v441 = vpop.permute.xlu0 %440
    %442 = vrot.lane.b32.xlu0 %v409, 64
    %v443 = vpop.permute.xlu0 %442
    %444 = vrot.lane.b32.xlu0 %v412, 64
    %v445 = vpop.permute.xlu0 %444
    %446 = vrot.lane.b32.xlu0 %v415, 64
    %v447 = vpop.permute.xlu0 %446
    %vm464 = vcmask 785920
    %465 = vst.msk [vmem:[#allocation3] sm:$0xff] %vm464, %v417
    %466 = vst.msk [vmem:[#allocation3 + $0x18] sm:$0xff] %vm464, %v419
    %467 = vst.msk [vmem:[#allocation3 + $0x30] sm:$0xff] %vm464, %v421
    %468 = vst.msk [vmem:[#allocation3 + $0x48] sm:$0xff] %vm464, %v423
    %469 = vst.msk [vmem:[#allocation3 + $0x60] sm:$0xff] %vm464, %v425
    %470 = vst.msk [vmem:[#allocation3 + $0x78] sm:$0xff] %vm464, %v427
    %471 = vst.msk [vmem:[#allocation3 + $0x90] sm:$0xff] %vm464, %v429
    %472 = vst.msk [vmem:[#allocation3 + $0xa8] sm:$0xff] %vm464, %v431
    %473 = vst.msk [vmem:[#allocation3 + $0xc0] sm:$0xff] %vm464, %v433
    %474 = vst.msk [vmem:[#allocation3 + $0xd8] sm:$0xff] %vm464, %v435
    %475 = vst.msk [vmem:[#allocation3 + $0xf0] sm:$0xff] %vm464, %v437
    %476 = vst.msk [vmem:[#allocation3 + $0x108] sm:$0xff] %vm464, %v439
    %477 = vst.msk [vmem:[#allocation3 + $0x120] sm:$0xff] %vm464, %v441
    %478 = vst.msk [vmem:[#allocation3 + $0x138] sm:$0xff] %vm464, %v443
    %479 = vst.msk [vmem:[#allocation3 + $0x150] sm:$0xff] %vm464, %v445
    %480 = vst.msk [vmem:[#allocation3 + $0x168] sm:$0xff] %vm464, %v447
    %483 = vrot.lane.b32.xlu0 %v167, 96
    %v484 = vpop.permute.xlu0 %483
    %485 = vrot.lane.b32.xlu0 %v169, 96
    %v486 = vpop.permute.xlu0 %485
    %487 = vrot.lane.b32.xlu0 %v171, 96
    %v488 = vpop.permute.xlu0 %487
    %489 = vrot.lane.b32.xlu0 %v173, 96
    %v490 = vpop.permute.xlu0 %489
    %491 = vrot.lane.b32.xlu0 %v175, 96
    %v492 = vpop.permute.xlu0 %491
    %493 = vrot.lane.b32.xlu0 %v177, 96
    %v494 = vpop.permute.xlu0 %493
    %495 = vrot.lane.b32.xlu0 %v179, 96
    %v496 = vpop.permute.xlu0 %495
    %497 = vrot.lane.b32.xlu0 %v181, 96
    %v498 = vpop.permute.xlu0 %497
    %499 = vrot.lane.b32.xlu0 %v187, 96
    %v500 = vpop.permute.xlu0 %499
    %501 = vrot.lane.b32.xlu0 %v189, 96
    %v502 = vpop.permute.xlu0 %501
    %503 = vrot.lane.b32.xlu0 %v191, 96
    %v504 = vpop.permute.xlu0 %503
    %505 = vrot.lane.b32.xlu0 %v193, 96
    %v506 = vpop.permute.xlu0 %505
    %507 = vrot.lane.b32.xlu0 %v195, 96
    %v508 = vpop.permute.xlu0 %507
    %509 = vrot.lane.b32.xlu0 %v197, 96
    %v510 = vpop.permute.xlu0 %509
    %511 = vrot.lane.b32.xlu0 %v199, 96
    %v512 = vpop.permute.xlu0 %511
    %513 = vrot.lane.b32.xlu0 %v201, 96
    %v514 = vpop.permute.xlu0 %513
    %vm531 = vcmask 1048320
    %532 = vst.msk [vmem:[#allocation3] sm:$0xff] %vm531, %v484
    %533 = vst.msk [vmem:[#allocation3 + $0x18] sm:$0xff] %vm531, %v486
    %534 = vst.msk [vmem:[#allocation3 + $0x30] sm:$0xff] %vm531, %v488
    %535 = vst.msk [vmem:[#allocation3 + $0x48] sm:$0xff] %vm531, %v490
    %536 = vst.msk [vmem:[#allocation3 + $0x60] sm:$0xff] %vm531, %v492
    %537 = vst.msk [vmem:[#allocation3 + $0x78] sm:$0xff] %vm531, %v494
    %538 = vst.msk [vmem:[#allocation3 + $0x90] sm:$0xff] %vm531, %v496
    %539 = vst.msk [vmem:[#allocation3 + $0xa8] sm:$0xff] %vm531, %v498
    %540 = vst.msk [vmem:[#allocation3 + $0xc0] sm:$0xff] %vm531, %v500
    %541 = vst.msk [vmem:[#allocation3 + $0xd8] sm:$0xff] %vm531, %v502
    %542 = vst.msk [vmem:[#allocation3 + $0xf0] sm:$0xff] %vm531, %v504
    %543 = vst.msk [vmem:[#allocation3 + $0x108] sm:$0xff] %vm531, %v506
    %544 = vst.msk [vmem:[#allocation3 + $0x120] sm:$0xff] %vm531, %v508
    %545 = vst.msk [vmem:[#allocation3 + $0x138] sm:$0xff] %vm531, %v510
    %546 = vst.msk [vmem:[#allocation3 + $0x150] sm:$0xff] %vm531, %v512
    %547 = vst.msk [vmem:[#allocation3 + $0x168] sm:$0xff] %vm531, %v514
    %v550 = vrot.slane %v181, 1
    %v551 = vrot.slane %v182, 1
    %v552 = vsel %vm253, %v550, %v551
    %v553 = vrot.slane %v201, 1
    %v554 = vrot.slane %v202, 1
    %v555 = vsel %vm253, %v553, %v554
    %572 = vst.msk [vmem:[#allocation3 + $0x8] sm:$0xff] %vm54, %v259
    %573 = vst.msk [vmem:[#allocation3 + $0x20] sm:$0xff] %vm54, %v262
    %574 = vst.msk [vmem:[#allocation3 + $0x38] sm:$0xff] %vm54, %v265
    %575 = vst.msk [vmem:[#allocation3 + $0x50] sm:$0xff] %vm54, %v268
    %576 = vst.msk [vmem:[#allocation3 + $0x68] sm:$0xff] %vm54, %v271
    %577 = vst.msk [vmem:[#allocation3 + $0x80] sm:$0xff] %vm54, %v274
    %578 = vst.msk [vmem:[#allocation3 + $0x98] sm:$0xff] %vm54, %v277
    %579 = vst.msk [vmem:[#allocation3 + $0xb0] sm:$0xff] %vm54, %v552
    %580 = vst.msk [vmem:[#allocation3 + $0xc8] sm:$0xff] %vm54, %v283
    %581 = vst.msk [vmem:[#allocation3 + $0xe0] sm:$0xff] %vm54, %v286
    %582 = vst.msk [vmem:[#allocation3 + $0xf8] sm:$0xff] %vm54, %v289
    %583 = vst.msk [vmem:[#allocation3 + $0x110] sm:$0xff] %vm54, %v292
    %584 = vst.msk [vmem:[#allocation3 + $0x128] sm:$0xff] %vm54, %v295
    %585 = vst.msk [vmem:[#allocation3 + $0x140] sm:$0xff] %vm54, %v298
    %586 = vst.msk [vmem:[#allocation3 + $0x158] sm:$0xff] %vm54, %v301
    %587 = vst.msk [vmem:[#allocation3 + $0x170] sm:$0xff] %vm54, %v555
    %v588 = vrot.slane %v181, 2
    %v589 = vrot.slane %v182, 2
    %v590 = vsel %vm367, %v588, %v589
    %v591 = vrot.slane %v201, 2
    %v592 = vrot.slane %v202, 2
    %v593 = vsel %vm367, %v591, %v592
    %594 = vrot.lane.b32.xlu0 %v373, 32
    %v595 = vpop.permute.xlu0 %594
    %596 = vrot.lane.b32.xlu0 %v376, 32
    %v597 = vpop.permute.xlu0 %596
    %598 = vrot.lane.b32.xlu0 %v379, 32
    %v599 = vpop.permute.xlu0 %598
    %600 = vrot.lane.b32.xlu0 %v382, 32
    %v601 = vpop.permute.xlu0 %600
    %602 = vrot.lane.b32.xlu0 %v385, 32
    %v603 = vpop.permute.xlu0 %602
    %604 = vrot.lane.b32.xlu0 %v388, 32
    %v605 = vpop.permute.xlu0 %604
    %606 = vrot.lane.b32.xlu0 %v391, 32
    %v607 = vpop.permute.xlu0 %606
    %608 = vrot.lane.b32.xlu0 %v590, 32
    %v609 = vpop.permute.xlu0 %608
    %610 = vrot.lane.b32.xlu0 %v397, 32
    %v611 = vpop.permute.xlu0 %610
    %612 = vrot.lane.b32.xlu0 %v400, 32
    %v613 = vpop.permute.xlu0 %612
    %614 = vrot.lane.b32.xlu0 %v403, 32
    %v615 = vpop.permute.xlu0 %614
    %616 = vrot.lane.b32.xlu0 %v406, 32
    %v617 = vpop.permute.xlu0 %616
    %618 = vrot.lane.b32.xlu0 %v409, 32
    %v619 = vpop.permute.xlu0 %618
    %620 = vrot.lane.b32.xlu0 %v412, 32
    %v621 = vpop.permute.xlu0 %620
    %622 = vrot.lane.b32.xlu0 %v415, 32
    %v623 = vpop.permute.xlu0 %622
    %624 = vrot.lane.b32.xlu0 %v593, 32
    %v625 = vpop.permute.xlu0 %624
    %642 = vst.msk [vmem:[#allocation3 + $0x8] sm:$0xff] %vm350, %v595
    %643 = vst.msk [vmem:[#allocation3 + $0x20] sm:$0xff] %vm350, %v597
    %644 = vst.msk [vmem:[#allocation3 + $0x38] sm:$0xff] %vm350, %v599
    %645 = vst.msk [vmem:[#allocation3 + $0x50] sm:$0xff] %vm350, %v601
    %646 = vst.msk [vmem:[#allocation3 + $0x68] sm:$0xff] %vm350, %v603
    %647 = vst.msk [vmem:[#allocation3 + $0x80] sm:$0xff] %vm350, %v605
    %648 = vst.msk [vmem:[#allocation3 + $0x98] sm:$0xff] %vm350, %v607
    %649 = vst.msk [vmem:[#allocation3 + $0xb0] sm:$0xff] %vm350, %v609
    %650 = vst.msk [vmem:[#allocation3 + $0xc8] sm:$0xff] %vm350, %v611
    %651 = vst.msk [vmem:[#allocation3 + $0xe0] sm:$0xff] %vm350, %v613
    %652 = vst.msk [vmem:[#allocation3 + $0xf8] sm:$0xff] %vm350, %v615
    %653 = vst.msk [vmem:[#allocation3 + $0x110] sm:$0xff] %vm350, %v617
    %654 = vst.msk [vmem:[#allocation3 + $0x128] sm:$0xff] %vm350, %v619
    %655 = vst.msk [vmem:[#allocation3 + $0x140] sm:$0xff] %vm350, %v621
    %656 = vst.msk [vmem:[#allocation3 + $0x158] sm:$0xff] %vm350, %v623
    %657 = vst.msk [vmem:[#allocation3 + $0x170] sm:$0xff] %vm350, %v625
    %660 = vrot.lane.b32.xlu0 %v169, 64
    %v661 = vpop.permute.xlu0 %660
    %662 = vrot.lane.b32.xlu0 %v171, 64
    %v663 = vpop.permute.xlu0 %662
    %664 = vrot.lane.b32.xlu0 %v173, 64
    %v665 = vpop.permute.xlu0 %664
    %666 = vrot.lane.b32.xlu0 %v175, 64
    %v667 = vpop.permute.xlu0 %666
    %668 = vrot.lane.b32.xlu0 %v177, 64
    %v669 = vpop.permute.xlu0 %668
    %670 = vrot.lane.b32.xlu0 %v179, 64
    %v671 = vpop.permute.xlu0 %670
    %672 = vrot.lane.b32.xlu0 %v181, 64
    %v673 = vpop.permute.xlu0 %672
    %674 = vrot.lane.b32.xlu0 %v183, 64
    %v675 = vpop.permute.xlu0 %674
    %676 = vrot.lane.b32.xlu0 %v189, 64
    %v677 = vpop.permute.xlu0 %676
    %678 = vrot.lane.b32.xlu0 %v191, 64
    %v679 = vpop.permute.xlu0 %678
    %680 = vrot.lane.b32.xlu0 %v193, 64
    %v681 = vpop.permute.xlu0 %680
    %682 = vrot.lane.b32.xlu0 %v195, 64
    %v683 = vpop.permute.xlu0 %682
    %684 = vrot.lane.b32.xlu0 %v197, 64
    %v685 = vpop.permute.xlu0 %684
    %686 = vrot.lane.b32.xlu0 %v199, 64
    %v687 = vpop.permute.xlu0 %686
    %688 = vrot.lane.b32.xlu0 %v201, 64
    %v689 = vpop.permute.xlu0 %688
    %690 = vrot.lane.b32.xlu0 %v203, 64
    %v691 = vpop.permute.xlu0 %690
    %708 = vst.msk [vmem:[#allocation3 + $0x8] sm:$0xff] %vm464, %v661
    %709 = vst.msk [vmem:[#allocation3 + $0x20] sm:$0xff] %vm464, %v663
    %710 = vst.msk [vmem:[#allocation3 + $0x38] sm:$0xff] %vm464, %v665
    %711 = vst.msk [vmem:[#allocation3 + $0x50] sm:$0xff] %vm464, %v667
    %712 = vst.msk [vmem:[#allocation3 + $0x68] sm:$0xff] %vm464, %v669
    %713 = vst.msk [vmem:[#allocation3 + $0x80] sm:$0xff] %vm464, %v671
    %714 = vst.msk [vmem:[#allocation3 + $0x98] sm:$0xff] %vm464, %v673
    %715 = vst.msk [vmem:[#allocation3 + $0xb0] sm:$0xff] %vm464, %v675
    %716 = vst.msk [vmem:[#allocation3 + $0xc8] sm:$0xff] %vm464, %v677
    %717 = vst.msk [vmem:[#allocation3 + $0xe0] sm:$0xff] %vm464, %v679
    %718 = vst.msk [vmem:[#allocation3 + $0xf8] sm:$0xff] %vm464, %v681
    %719 = vst.msk [vmem:[#allocation3 + $0x110] sm:$0xff] %vm464, %v683
    %720 = vst.msk [vmem:[#allocation3 + $0x128] sm:$0xff] %vm464, %v685
    %721 = vst.msk [vmem:[#allocation3 + $0x140] sm:$0xff] %vm464, %v687
    %722 = vst.msk [vmem:[#allocation3 + $0x158] sm:$0xff] %vm464, %v689
    %723 = vst.msk [vmem:[#allocation3 + $0x170] sm:$0xff] %vm464, %v691
    %v726 = vrot.slane %v183, 1
    %v727 = vrot.slane %v184, 1
    %v728 = vsel %vm253, %v726, %v727
    %v729 = vrot.slane %v203, 1
    %v730 = vrot.slane %v204, 1
    %v731 = vsel %vm253, %v729, %v730
    %732 = vrot.lane.b32.xlu0 %v262, 96
    %v733 = vpop.permute.xlu0 %732
    %734 = vrot.lane.b32.xlu0 %v265, 96
    %v735 = vpop.permute.xlu0 %734
    %736 = vrot.lane.b32.xlu0 %v268, 96
    %v737 = vpop.permute.xlu0 %736
    %738 = vrot.lane.b32.xlu0 %v271, 96
    %v739 = vpop.permute.xlu0 %738
    %740 = vrot.lane.b32.xlu0 %v274, 96
    %v741 = vpop.permute.xlu0 %740
    %742 = vrot.lane.b32.xlu0 %v277, 96
    %v743 = vpop.permute.xlu0 %742
    %744 = vrot.lane.b32.xlu0 %v552, 96
    %v745 = vpop.permute.xlu0 %744
    %746 = vrot.lane.b32.xlu0 %v728, 96
    %v747 = vpop.permute.xlu0 %746
    %748 = vrot.lane.b32.xlu0 %v286, 96
    %v749 = vpop.permute.xlu0 %748
    %750 = vrot.lane.b32.xlu0 %v289, 96
    %v751 = vpop.permute.xlu0 %750
    %752 = vrot.lane.b32.xlu0 %v292, 96
    %v753 = vpop.permute.xlu0 %752
    %754 = vrot.lane.b32.xlu0 %v295, 96
    %v755 = vpop.permute.xlu0 %754
    %756 = vrot.lane.b32.xlu0 %v298, 96
    %v757 = vpop.permute.xlu0 %756
    %758 = vrot.lane.b32.xlu0 %v301, 96
    %v759 = vpop.permute.xlu0 %758
    %760 = vrot.lane.b32.xlu0 %v555, 96
    %v761 = vpop.permute.xlu0 %760
    %762 = vrot.lane.b32.xlu0 %v731, 96
    %v763 = vpop.permute.xlu0 %762
    %780 = vst.msk [vmem:[#allocation3 + $0x8] sm:$0xff] %vm531, %v733
    %781 = vst.msk [vmem:[#allocation3 + $0x20] sm:$0xff] %vm531, %v735
    %782 = vst.msk [vmem:[#allocation3 + $0x38] sm:$0xff] %vm531, %v737
    %783 = vst.msk [vmem:[#allocation3 + $0x50] sm:$0xff] %vm531, %v739
    %784 = vst.msk [vmem:[#allocation3 + $0x68] sm:$0xff] %vm531, %v741
    %785 = vst.msk [vmem:[#allocation3 + $0x80] sm:$0xff] %vm531, %v743
    %786 = vst.msk [vmem:[#allocation3 + $0x98] sm:$0xff] %vm531, %v745
    %787 = vst.msk [vmem:[#allocation3 + $0xb0] sm:$0xff] %vm531, %v747
    %788 = vst.msk [vmem:[#allocation3 + $0xc8] sm:$0xff] %vm531, %v749
    %789 = vst.msk [vmem:[#allocation3 + $0xe0] sm:$0xff] %vm531, %v751
    %790 = vst.msk [vmem:[#allocation3 + $0xf8] sm:$0xff] %vm531, %v753
    %791 = vst.msk [vmem:[#allocation3 + $0x110] sm:$0xff] %vm531, %v755
    %792 = vst.msk [vmem:[#allocation3 + $0x128] sm:$0xff] %vm531, %v757
    %793 = vst.msk [vmem:[#allocation3 + $0x140] sm:$0xff] %vm531, %v759
    %794 = vst.msk [vmem:[#allocation3 + $0x158] sm:$0xff] %vm531, %v761
    %795 = vst.msk [vmem:[#allocation3 + $0x170] sm:$0xff] %vm531, %v763
    %v796 = vrot.slane %v183, 2
    %v797 = vrot.slane %v184, 2
    %v798 = vsel %vm367, %v796, %v797
    %v799 = vrot.slane %v203, 2
    %v800 = vrot.slane %v204, 2
    %v801 = vsel %vm367, %v799, %v800
    %818 = vst.msk [vmem:[#allocation3 + $0x10] sm:$0xff] %vm54, %v376
    %819 = vst.msk [vmem:[#allocation3 + $0x28] sm:$0xff] %vm54, %v379
    %820 = vst.msk [vmem:[#allocation3 + $0x40] sm:$0xff] %vm54, %v382
    %821 = vst.msk [vmem:[#allocation3 + $0x58] sm:$0xff] %vm54, %v385
    %822 = vst.msk [vmem:[#allocation3 + $0x70] sm:$0xff] %vm54, %v388
    %823 = vst.msk [vmem:[#allocation3 + $0x88] sm:$0xff] %vm54, %v391
    %824 = vst.msk [vmem:[#allocation3 + $0xa0] sm:$0xff] %vm54, %v590
    %825 = vst.msk [vmem:[#allocation3 + $0xb8] sm:$0xff] %vm54, %v798
    %826 = vst.msk [vmem:[#allocation3 + $0xd0] sm:$0xff] %vm54, %v400
    %827 = vst.msk [vmem:[#allocation3 + $0xe8] sm:$0xff] %vm54, %v403
    %828 = vst.msk [vmem:[#allocation3 + $0x100] sm:$0xff] %vm54, %v406
    %829 = vst.msk [vmem:[#allocation3 + $0x118] sm:$0xff] %vm54, %v409
    %830 = vst.msk [vmem:[#allocation3 + $0x130] sm:$0xff] %vm54, %v412
    %831 = vst.msk [vmem:[#allocation3 + $0x148] sm:$0xff] %vm54, %v415
    %832 = vst.msk [vmem:[#allocation3 + $0x160] sm:$0xff] %vm54, %v593
    %833 = vst.msk [vmem:[#allocation3 + $0x178] sm:$0xff] %vm54, %v801
    %v834 = vld [vmem:[#allocation3] sm:$0xff]
    %v835 = vld [vmem:[#allocation3 + $0x8] sm:$0xff]
    %v836 = vld [vmem:[#allocation3 + $0x10] sm:$0xff]
    %v837 = vld [vmem:[#allocation3 + $0x18] sm:$0xff]
    %v838 = vld [vmem:[#allocation3 + $0x20] sm:$0xff]
    %v839 = vld [vmem:[#allocation3 + $0x28] sm:$0xff]
    %v840 = vld [vmem:[#allocation3 + $0x30] sm:$0xff]
    %v841 = vld [vmem:[#allocation3 + $0x38] sm:$0xff]
    %v842 = vld [vmem:[#allocation3 + $0x40] sm:$0xff]
    %v843 = vld [vmem:[#allocation3 + $0x48] sm:$0xff]
    %v844 = vld [vmem:[#allocation3 + $0x50] sm:$0xff]
    %v845 = vld [vmem:[#allocation3 + $0x58] sm:$0xff]
    %v846 = vld [vmem:[#allocation3 + $0x60] sm:$0xff]
    %v847 = vld [vmem:[#allocation3 + $0x68] sm:$0xff]
    %v848 = vld [vmem:[#allocation3 + $0x70] sm:$0xff]
    %v849 = vld [vmem:[#allocation3 + $0x78] sm:$0xff]
    %v850 = vld [vmem:[#allocation3 + $0x80] sm:$0xff]
    %v851 = vld [vmem:[#allocation3 + $0x88] sm:$0xff]
    %v852 = vld [vmem:[#allocation3 + $0x90] sm:$0xff]
    %v853 = vld [vmem:[#allocation3 + $0x98] sm:$0xff]
    %v854 = vld [vmem:[#allocation3 + $0xa0] sm:$0xff]
    %v855 = vld [vmem:[#allocation3 + $0xa8] sm:$0xff]
    %v856 = vld [vmem:[#allocation3 + $0xb0] sm:$0xff]
    %v857 = vld [vmem:[#allocation3 + $0xb8] sm:$0xff]
    %v858 = vld [vmem:[#allocation3 + $0xc0] sm:$0xff]
    %v859 = vld [vmem:[#allocation3 + $0xc8] sm:$0xff]
    %v860 = vld [vmem:[#allocation3 + $0xd0] sm:$0xff]
    %v861 = vld [vmem:[#allocation3 + $0xd8] sm:$0xff]
    %v862 = vld [vmem:[#allocation3 + $0xe0] sm:$0xff]
    %v863 = vld [vmem:[#allocation3 + $0xe8] sm:$0xff]
    %v864 = vld [vmem:[#allocation3 + $0xf0] sm:$0xff]
    %v865 = vld [vmem:[#allocation3 + $0xf8] sm:$0xff]
    %v866 = vld [vmem:[#allocation3 + $0x100] sm:$0xff]
    %v867 = vld [vmem:[#allocation3 + $0x108] sm:$0xff]
    %v868 = vld [vmem:[#allocation3 + $0x110] sm:$0xff]
    %v869 = vld [vmem:[#allocation3 + $0x118] sm:$0xff]
    %v870 = vld [vmem:[#allocation3 + $0x120] sm:$0xff]
    %v871 = vld [vmem:[#allocation3 + $0x128] sm:$0xff]
    %v872 = vld [vmem:[#allocation3 + $0x130] sm:$0xff]
    %v873 = vld [vmem:[#allocation3 + $0x138] sm:$0xff]
    %v874 = vld [vmem:[#allocation3 + $0x140] sm:$0xff]
    %v875 = vld [vmem:[#allocation3 + $0x148] sm:$0xff]
    %v876 = vld [vmem:[#allocation3 + $0x150] sm:$0xff]
    %v877 = vld [vmem:[#allocation3 + $0x158] sm:$0xff]
    %v878 = vld [vmem:[#allocation3 + $0x160] sm:$0xff]
    %v879 = vld [vmem:[#allocation3 + $0x168] sm:$0xff]
    %v880 = vld [vmem:[#allocation3 + $0x170] sm:$0xff]
    %v881 = vld [vmem:[#allocation3 + $0x178] sm:$0xff]
    %v883 = vsel %vm54, %v836, 0
    %v886 = vsel %vm54, %v839, 0
    %v889 = vsel %vm54, %v842, 0
    %v892 = vsel %vm54, %v845, 0
    %v895 = vsel %vm54, %v848, 0
    %v898 = vsel %vm54, %v851, 0
    %v901 = vsel %vm54, %v854, 0
    %v904 = vsel %vm54, %v857, 0
    %v907 = vsel %vm54, %v860, 0
    %v910 = vsel %vm54, %v863, 0
    %v913 = vsel %vm54, %v866, 0
    %v916 = vsel %vm54, %v869, 0
    %v919 = vsel %vm54, %v872, 0
    %v922 = vsel %vm54, %v875, 0
    %v925 = vsel %vm54, %v878, 0
    %v928 = vsel %vm54, %v881, 0
    %930 = vmatprep.subr.mxu0 0.0
    %931 = vmatpush1.msra.mxu0 %v129
    %932 = vmatprep.subr.mxu0 0.0
    %933 = vmatpush1.msra.mxu0 %v130
    %934 = vmatprep.subr.mxu0 0.0
    %935 = vmatpush1.msra.mxu0 %v131
    %936 = vmatprep.subr.mxu0 0.0
    %937 = vmatpush1.msra.mxu0 %v132
    %938 = vmatprep.subr.mxu0 0.0
    %939 = vmatpush1.msra.mxu0 %v133
    %940 = vmatprep.subr.mxu0 0.0
    %941 = vmatpush1.msra.mxu0 %v134
    %942 = vmatprep.subr.mxu0 0.0
    %943 = vmatpush1.msra.mxu0 %v135
    %944 = vmatprep.subr.mxu0 0.0
    %945 = vmatpush1.msra.mxu0 %v136
    %946 = vmatprep.subr.mxu0 0.0
    %947 = vmatpush1.msra.mxu0 %v137
    %948 = vmatprep.subr.mxu0 0.0
    %949 = vmatpush1.msra.mxu0 %v138
    %950 = vmatprep.subr.mxu0 0.0
    %951 = vmatpush1.msra.mxu0 %v139
    %952 = vmatprep.subr.mxu0 0.0
    %953 = vmatpush1.msra.mxu0 %v140
    %954 = vmatprep.subr.mxu0 0.0
    %955 = vmatpush1.msra.mxu0 %v141
    %956 = vmatprep.subr.mxu0 0.0
    %957 = vmatpush1.msra.mxu0 %v142
    %958 = vmatprep.subr.mxu0 0.0
    %959 = vmatpush1.msra.mxu0 %v143
    %960 = vmatprep.subr.mxu0 0.0
    %961 = vmatpush1.msra.mxu0 %v144
    %962 = vmatprep.subr.mxu0 0.0
    %963 = vmatpush1.msra.mxu0 %v145
    %964 = vmatprep.subr.mxu0 0.0
    %965 = vmatpush1.msra.mxu0 %v146
    %966 = vmatprep.subr.mxu0 0.0
    %967 = vmatpush1.msra.mxu0 %v147
    %968 = vmatprep.subr.mxu0 0.0
    %969 = vmatpush1.msra.mxu0 %v148
    %970 = vmatprep.subr.mxu0 0.0
    %971 = vmatpush1.msra.mxu0 %v149
    %972 = vmatprep.subr.mxu0 0.0
    %973 = vmatpush1.msra.mxu0 %v150
    %974 = vmatprep.subr.mxu0 0.0
    %975 = vmatpush1.msra.mxu0 %v151
    %976 = vmatprep.subr.mxu0 0.0
    %977 = vmatpush1.msra.mxu0 %v152
    %978 = vmatprep.subr.mxu0 0.0
    %979 = vmatpush1.msra.mxu0 %v153
    %980 = vmatprep.subr.mxu0 0.0
    %981 = vmatpush1.msra.mxu0 %v154
    %982 = vmatprep.subr.mxu0 0.0
    %983 = vmatpush1.msra.mxu0 %v155
    %984 = vmatprep.subr.mxu0 0.0
    %985 = vmatpush1.msra.mxu0 %v156
    %986 = vmatprep.subr.mxu0 0.0
    %987 = vmatpush1.msra.mxu0 %v157
    %988 = vmatprep.subr.mxu0 0.0
    %989 = vmatpush1.msra.mxu0 %v158
    %990 = vmatprep.subr.mxu0 0.0
    %991 = vmatpush1.msra.mxu0 %v159
    %992 = vmatprep.subr.mxu0 0.0
    %993 = vmatpush1.msra.mxu0 %v160
    %994 = vmatprep.mubr.f32.mxu0 %v835
    %995 = vmatmul.mubr.f32.gmra.mrb[0].mxu0 %v834
    %v996 = vpop.f32.mrb[0].mxu0
    %v997 = vadd.f32 0.0, %v996
    %v998 = vpop.f32.mrb[0].mxu0
    %999 = vmatprep.mubr.f32.mxu0 %v838
    %1000 = vmatmul.mubr.f32.gmra.mrb[0].mxu0 %v837
    %v1001 = vpop.f32.mrb[0].mxu0
    %v1002 = vadd.f32 0.0, %v1001
    %v1003 = vpop.f32.mrb[0].mxu0
    %1004 = vmatprep.mubr.f32.mxu0 %v841
    %1005 = vmatmul.mubr.f32.gmra.mrb[0].mxu0 %v840
    %v1006 = vpop.f32.mrb[0].mxu0
    %v1007 = vadd.f32 0.0, %v1006
    %v1008 = vpop.f32.mrb[0].mxu0
    %1009 = vmatprep.mubr.f32.mxu0 %v844
    %1010 = vmatmul.mubr.f32.gmra.mrb[0].mxu0 %v843
    %v1011 = vpop.f32.mrb[0].mxu0
    %v1012 = vadd.f32 0.0, %v1011
    %v1013 = vpop.f32.mrb[0].mxu0
    %1014 = vmatprep.mubr.f32.mxu0 %v847
    %1015 = vmatmul.mubr.f32.gmra.mrb[0].mxu0 %v846
    %v1016 = vpop.f32.mrb[0].mxu0
    %v1017 = vadd.f32 0.0, %v1016
    %v1018 = vpop.f32.mrb[0].mxu0
    %1019 = vmatprep.mubr.f32.mxu0 %v850
    %1020 = vmatmul.mubr.f32.gmra.mrb[0].mxu0 %v849
    %v1021 = vpop.f32.mrb[0].mxu0
    %v1022 = vadd.f32 0.0, %v1021
    %v1023 = vpop.f32.mrb[0].mxu0
    %1024 = vmatprep.mubr.f32.mxu0 %v853
    %1025 = vmatmul.mubr.f32.gmra.mrb[0].mxu0 %v852
    %v1026 = vpop.f32.mrb[0].mxu0
    %v1027 = vadd.f32 0.0, %v1026
    %v1028 = vpop.f32.mrb[0].mxu0
    %1029 = vmatprep.mubr.f32.mxu0 %v856
    %1030 = vmatmul.mubr.f32.gmra.mrb[0].mxu0 %v855
    %v1031 = vpop.f32.mrb[0].mxu0
    %v1032 = vadd.f32 0.0, %v1031
    %v1033 = vpop.f32.mrb[0].mxu0
    %1034 = vmatprep.mubr.f32.mxu0 %v859
    %1035 = vmatmul.mubr.f32.gmra.mrb[0].mxu0 %v858
    %v1036 = vpop.f32.mrb[0].mxu0
    %v1037 = vadd.f32 0.0, %v1036
    %v1038 = vpop.f32.mrb[0].mxu0
    %1039 = vmatprep.mubr.f32.mxu0 %v862
    %1040 = vmatmul.mubr.f32.gmra.mrb[0].mxu0 %v861
    %v1041 = vpop.f32.mrb[0].mxu0
    %v1042 = vadd.f32 0.0, %v1041
    %v1043 = vpop.f32.mrb[0].mxu0
    %1044 = vmatprep.mubr.f32.mxu0 %v865
    %1045 = vmatmul.mubr.f32.gmra.mrb[0].mxu0 %v864
    %v1046 = vpop.f32.mrb[0].mxu0
    %v1047 = vadd.f32 0.0, %v1046
    %v1048 = vpop.f32.mrb[0].mxu0
    %1049 = vmatprep.mubr.f32.mxu0 %v868
    %1050 = vmatmul.mubr.f32.gmra.mrb[0].mxu0 %v867
    %v1051 = vpop.f32.mrb[0].mxu0
    %v1052 = vadd.f32 0.0, %v1051
    %v1053 = vpop.f32.mrb[0].mxu0
    %1054 = vmatprep.mubr.f32.mxu0 %v871
    %1055 = vmatmul.mubr.f32.gmra.mrb[0].mxu0 %v870
    %v1056 = vpop.f32.mrb[0].mxu0
    %v1057 = vadd.f32 0.0, %v1056
    %v1058 = vpop.f32.mrb[0].mxu0
    %1059 = vmatprep.mubr.f32.mxu0 %v874
    %1060 = vmatmul.mubr.f32.gmra.mrb[0].mxu0 %v873
    %v1061 = vpop.f32.mrb[0].mxu0
    %v1062 = vadd.f32 0.0, %v1061
    %v1063 = vpop.f32.mrb[0].mxu0
    %1064 = vmatprep.mubr.f32.mxu0 %v877
    %1065 = vmatmul.mubr.f32.gmra.mrb[0].mxu0 %v876
    %v1066 = vpop.f32.mrb[0].mxu0
    %v1067 = vadd.f32 0.0, %v1066
    %v1068 = vpop.f32.mrb[0].mxu0
    %1069 = vmatprep.mubr.f32.mxu0 %v880
    %1070 = vmatmul.mubr.f32.gmra.mrb[0].mxu0 %v879
    %v1071 = vpop.f32.mrb[0].mxu0
    %v1072 = vadd.f32 0.0, %v1071
    %v1073 = vpop.f32.mrb[0].mxu0
    %1074 = vdwg.mxu0
    %1075 = vmatprep.subr.mxu0 0.0
    %1076 = vmatpush1.msra.mxu0 %v161
    %1077 = vmatprep.subr.mxu0 0.0
    %1078 = vmatpush1.msra.mxu0 %v162
    %1079 = vmatprep.subr.mxu0 0.0
    %1080 = vmatpush1.msra.mxu0 %v163
    %1081 = vmatprep.subr.mxu0 0.0
    %1082 = vmatpush1.msra.mxu0 %v164
    %1083 = vmatprep.subr.mxu0 0.0
    %1084 = vmatpush1.msra.mxu0 0.0
    %1085 = vmatprep.subr.mxu0 0.0
    %1086 = vmatpush1.msra.mxu0 0.0
    %1087 = vmatprep.subr.mxu0 0.0
    %1088 = vmatpush1.msra.mxu0 0.0
    %1089 = vmatprep.subr.mxu0 0.0
    %1090 = vmatpush1.msra.mxu0 0.0
    %1091 = vmatprep.subr.mxu0 0.0
    %1092 = vmatpush1.msra.mxu0 0.0
    %1093 = vmatprep.subr.mxu0 0.0
    %1094 = vmatpush1.msra.mxu0 0.0
    %1095 = vmatprep.subr.mxu0 0.0
    %1096 = vmatpush1.msra.mxu0 0.0
    %1097 = vmatprep.subr.mxu0 0.0
    %1098 = vmatpush1.msra.mxu0 0.0
    %1099 = vmatprep.subr.mxu0 0.0
    %1100 = vmatpush1.msra.mxu0 0.0
    %1101 = vmatprep.subr.mxu0 0.0
    %1102 = vmatpush1.msra.mxu0 0.0
    %1103 = vmatprep.subr.mxu0 0.0
    %1104 = vmatpush1.msra.mxu0 0.0
    %1105 = vmatprep.subr.mxu0 0.0
    %1106 = vmatpush1.msra.mxu0 0.0
    %1107 = vmatprep.subr.mxu0 0.0
    %1108 = vmatpush1.msra.mxu0 0.0
    %1109 = vmatprep.subr.mxu0 0.0
    %1110 = vmatpush1.msra.mxu0 0.0
    %1111 = vmatprep.subr.mxu0 0.0
    %1112 = vmatpush1.msra.mxu0 0.0
    %1113 = vmatprep.subr.mxu0 0.0
    %1114 = vmatpush1.msra.mxu0 0.0
    %1115 = vmatprep.subr.mxu0 0.0
    %1116 = vmatpush1.msra.mxu0 0.0
    %1117 = vmatprep.subr.mxu0 0.0
    %1118 = vmatpush1.msra.mxu0 0.0
    %1119 = vmatprep.subr.mxu0 0.0
    %1120 = vmatpush1.msra.mxu0 0.0
    %1121 = vmatprep.subr.mxu0 0.0
    %1122 = vmatpush1.msra.mxu0 0.0
    %1123 = vmatprep.subr.mxu0 0.0
    %1124 = vmatpush1.msra.mxu0 0.0
    %1125 = vmatprep.subr.mxu0 0.0
    %1126 = vmatpush1.msra.mxu0 0.0
    %1127 = vmatprep.subr.mxu0 0.0
    %1128 = vmatpush1.msra.mxu0 0.0
    %1129 = vmatprep.subr.mxu0 0.0
    %1130 = vmatpush1.msra.mxu0 0.0
    %1131 = vmatprep.subr.mxu0 0.0
    %1132 = vmatpush1.msra.mxu0 0.0
    %1133 = vmatprep.subr.mxu0 0.0
    %1134 = vmatpush1.msra.mxu0 0.0
    %1135 = vmatprep.subr.mxu0 0.0
    %1136 = vmatpush1.msra.mxu0 0.0
    %1137 = vmatprep.subr.mxu0 0.0
    %1138 = vmatpush1.msra.mxu0 0.0
    %1139 = vmatprep.mubr.f32.mxu0 0.0
    %1140 = vmatmul.mubr.f32.gmra.mrb[0].mxu0 %v883
    %v1141 = vpop.f32.mrb[0].mxu0
    %v1142 = vadd.f32 %v997, %v1141
    %v1143 = vpop.f32.mrb[0].mxu0
    %1144 = vmatprep.mubr.f32.mxu0 0.0
    %1145 = vmatmul.mubr.f32.gmra.mrb[0].mxu0 %v886
    %v1146 = vpop.f32.mrb[0].mxu0
    %v1147 = vadd.f32 %v1002, %v1146
    %v1148 = vpop.f32.mrb[0].mxu0
    %1149 = vmatprep.mubr.f32.mxu0 0.0
    %1150 = vmatmul.mubr.f32.gmra.mrb[0].mxu0 %v889
    %v1151 = vpop.f32.mrb[0].mxu0
    %v1152 = vadd.f32 %v1007, %v1151
    %v1153 = vpop.f32.mrb[0].mxu0
    %1154 = vmatprep.mubr.f32.mxu0 0.0
    %1155 = vmatmul.mubr.f32.gmra.mrb[0].mxu0 %v892
    %v1156 = vpop.f32.mrb[0].mxu0
    %v1157 = vadd.f32 %v1012, %v1156
    %v1158 = vpop.f32.mrb[0].mxu0
    %1159 = vmatprep.mubr.f32.mxu0 0.0
    %1160 = vmatmul.mubr.f32.gmra.mrb[0].mxu0 %v895
    %v1161 = vpop.f32.mrb[0].mxu0
    %v1162 = vadd.f32 %v1017, %v1161
    %v1163 = vpop.f32.mrb[0].mxu0
    %1164 = vmatprep.mubr.f32.mxu0 0.0
    %1165 = vmatmul.mubr.f32.gmra.mrb[0].mxu0 %v898
    %v1166 = vpop.f32.mrb[0].mxu0
    %v1167 = vadd.f32 %v1022, %v1166
    %v1168 = vpop.f32.mrb[0].mxu0
    %1169 = vmatprep.mubr.f32.mxu0 0.0
    %1170 = vmatmul.mubr.f32.gmra.mrb[0].mxu0 %v901
    %v1171 = vpop.f32.mrb[0].mxu0
    %v1172 = vadd.f32 %v1027, %v1171
    %v1173 = vpop.f32.mrb[0].mxu0
    %1174 = vmatprep.mubr.f32.mxu0 0.0
    %1175 = vmatmul.mubr.f32.gmra.mrb[0].mxu0 %v904
    %v1176 = vpop.f32.mrb[0].mxu0
    %v1177 = vadd.f32 %v1032, %v1176
    %v1178 = vpop.f32.mrb[0].mxu0
    %1179 = vmatprep.mubr.f32.mxu0 0.0
    %1180 = vmatmul.mubr.f32.gmra.mrb[0].mxu0 %v907
    %v1181 = vpop.f32.mrb[0].mxu0
    %v1182 = vadd.f32 %v1037, %v1181
    %v1183 = vpop.f32.mrb[0].mxu0
    %1184 = vmatprep.mubr.f32.mxu0 0.0
    %1185 = vmatmul.mubr.f32.gmra.mrb[0].mxu0 %v910
    %v1186 = vpop.f32.mrb[0].mxu0
    %v1187 = vadd.f32 %v1042, %v1186
    %v1188 = vpop.f32.mrb[0].mxu0
    %1189 = vmatprep.mubr.f32.mxu0 0.0
    %1190 = vmatmul.mubr.f32.gmra.mrb[0].mxu0 %v913
    %v1191 = vpop.f32.mrb[0].mxu0
    %v1192 = vadd.f32 %v1047, %v1191
    %v1193 = vpop.f32.mrb[0].mxu0
    %1194 = vmatprep.mubr.f32.mxu0 0.0
    %1195 = vmatmul.mubr.f32.gmra.mrb[0].mxu0 %v916
    %v1196 = vpop.f32.mrb[0].mxu0
    %v1197 = vadd.f32 %v1052, %v1196
    %v1198 = vpop.f32.mrb[0].mxu0
    %1199 = vmatprep.mubr.f32.mxu0 0.0
    %1200 = vmatmul.mubr.f32.gmra.mrb[0].mxu0 %v919
    %v1201 = vpop.f32.mrb[0].mxu0
    %v1202 = vadd.f32 %v1057, %v1201
    %v1203 = vpop.f32.mrb[0].mxu0
    %1204 = vmatprep.mubr.f32.mxu0 0.0
    %1205 = vmatmul.mubr.f32.gmra.mrb[0].mxu0 %v922
    %v1206 = vpop.f32.mrb[0].mxu0
    %v1207 = vadd.f32 %v1062, %v1206
    %v1208 = vpop.f32.mrb[0].mxu0
    %1209 = vmatprep.mubr.f32.mxu0 0.0
    %1210 = vmatmul.mubr.f32.gmra.mrb[0].mxu0 %v925
    %v1211 = vpop.f32.mrb[0].mxu0
    %v1212 = vadd.f32 %v1067, %v1211
    %v1213 = vpop.f32.mrb[0].mxu0
    %1214 = vmatprep.mubr.f32.mxu0 0.0
    %1215 = vmatmul.mubr.f32.gmra.mrb[0].mxu0 %v928
    %v1216 = vpop.f32.mrb[0].mxu0
    %v1217 = vadd.f32 %v1072, %v1216
    %v1218 = vpop.f32.mrb[0].mxu0
    %1219 = vdwg.mxu0
    %v1220 = vld [vmem:[%s2] sm:$0x1]
    %v1221 = vld [vmem:[%s3] sm:$0x1]
    %v1222 = vsel %vm54, %v1142, 0.0
    %v1223 = vsel %vm54, %v1147, 0.0
    %v1224 = vadd.f32 %v1222, %v1223
    %v1225 = vsel %vm54, %v1152, 0.0
    %v1226 = vadd.f32 %v1224, %v1225
    %v1227 = vsel %vm54, %v1157, 0.0
    %v1228 = vadd.f32 %v1226, %v1227
    %v1229 = vsel %vm54, %v1162, 0.0
    %v1230 = vadd.f32 %v1228, %v1229
    %v1231 = vsel %vm54, %v1167, 0.0
    %v1232 = vadd.f32 %v1230, %v1231
    %v1233 = vsel %vm54, %v1172, 0.0
    %v1234 = vadd.f32 %v1232, %v1233
    %v1235 = vsel %vm54, %v1177, 0.0
    %v1236 = vadd.f32 %v1234, %v1235
    %v1237 = vsel %vm54, %v1182, 0.0
    %v1238 = vadd.f32 %v1236, %v1237
    %v1239 = vsel %vm54, %v1187, 0.0
    %v1240 = vadd.f32 %v1238, %v1239
    %v1241 = vsel %vm54, %v1192, 0.0
    %v1242 = vadd.f32 %v1240, %v1241
    %v1243 = vsel %vm54, %v1197, 0.0
    %v1244 = vadd.f32 %v1242, %v1243
    %v1245 = vsel %vm54, %v1202, 0.0
    %v1246 = vadd.f32 %v1244, %v1245
    %v1247 = vsel %vm54, %v1207, 0.0
    %v1248 = vadd.f32 %v1246, %v1247
    %v1249 = vsel %vm54, %v1212, 0.0
    %v1250 = vadd.f32 %v1248, %v1249
    %v1251 = vsel %vm54, %v1217, 0.0
    %v1252 = vadd.f32 %v1250, %v1251
    %v1253 = vrot.slane %v1252, 4
    %v1254 = vadd.f32 %v1252, %v1253
    %v1255 = vrot.slane %v1254, 2
    %v1256 = vadd.f32 %v1254, %v1255
    %v1257 = vrot.slane %v1256, 1
    %v1258 = vadd.f32 %v1256, %v1257
    %v1259 = vmul.f32 %v1142, %v1142
    %v1260 = vmul.f32 %v1147, %v1147
    %v1261 = vmul.f32 %v1152, %v1152
    %v1262 = vmul.f32 %v1157, %v1157
    %v1263 = vmul.f32 %v1162, %v1162
    %v1264 = vmul.f32 %v1167, %v1167
    %v1265 = vmul.f32 %v1172, %v1172
    %v1266 = vmul.f32 %v1177, %v1177
    %v1267 = vmul.f32 %v1182, %v1182
    %v1268 = vmul.f32 %v1187, %v1187
    %v1269 = vmul.f32 %v1192, %v1192
    %v1270 = vmul.f32 %v1197, %v1197
    %v1271 = vmul.f32 %v1202, %v1202
    %v1272 = vmul.f32 %v1207, %v1207
    %v1273 = vmul.f32 %v1212, %v1212
    %v1274 = vmul.f32 %v1217, %v1217
    %v1275 = vsel %vm54, %v1259, 0.0
    %v1276 = vsel %vm54, %v1260, 0.0
    %v1277 = vadd.f32 %v1275, %v1276
    %v1278 = vsel %vm54, %v1261, 0.0
    %v1279 = vadd.f32 %v1277, %v1278
    %v1280 = vsel %vm54, %v1262, 0.0
    %v1281 = vadd.f32 %v1279, %v1280
    %v1282 = vsel %vm54, %v1263, 0.0
    %v1283 = vadd.f32 %v1281, %v1282
    %v1284 = vsel %vm54, %v1264, 0.0
    %v1285 = vadd.f32 %v1283, %v1284
    %v1286 = vsel %vm54, %v1265, 0.0
    %v1287 = vadd.f32 %v1285, %v1286
    %v1288 = vsel %vm54, %v1266, 0.0
    %v1289 = vadd.f32 %v1287, %v1288
    %v1290 = vsel %vm54, %v1267, 0.0
    %v1291 = vadd.f32 %v1289, %v1290
    %v1292 = vsel %vm54, %v1268, 0.0
    %v1293 = vadd.f32 %v1291, %v1292
    %v1294 = vsel %vm54, %v1269, 0.0
    %v1295 = vadd.f32 %v1293, %v1294
    %v1296 = vsel %vm54, %v1270, 0.0
    %v1297 = vadd.f32 %v1295, %v1296
    %v1298 = vsel %vm54, %v1271, 0.0
    %v1299 = vadd.f32 %v1297, %v1298
    %v1300 = vsel %vm54, %v1272, 0.0
    %v1301 = vadd.f32 %v1299, %v1300
    %v1302 = vsel %vm54, %v1273, 0.0
    %v1303 = vadd.f32 %v1301, %v1302
    %v1304 = vsel %vm54, %v1274, 0.0
    %v1305 = vadd.f32 %v1303, %v1304
    %v1306 = vrot.slane %v1305, 4
    %v1307 = vadd.f32 %v1305, %v1306
    %v1308 = vrot.slane %v1307, 2
    %v1309 = vadd.f32 %v1307, %v1308
    %v1310 = vrot.slane %v1309, 1
    %v1311 = vadd.f32 %v1309, %v1310
    %v1312 = vmul.f32 %v1258, 0.0078125
    %v1313 = vmul.f32 %v1311, 0.0078125
    %v1314 = vmul.f32 %v1312, %v1312
    %v1315 = vsub.f32 %v1313, %v1314
    %v1316 = vadd.f32 %v1315, 1e-05
    %v1317 = vrsqrt.pop %v1316
    %v1318 = vmul.f32 %v1220, %v1317
    %v1319 = vmul.f32 %v1312, %v1318
    %v1320 = vsub.f32 %v1221, %v1319
    %v1322 = vlaneseq
    %v1323 = vshrl.u32 %v1322, 7
    %v1324 = vsub.s32 0, %v1323
    %v1325 = vrot.slane %v1318, %v1324
    %v1327 = vmul.f32 %v1142, %v1325
    %v1328 = vmul.f32 %v1147, %v1325
    %v1329 = vmul.f32 %v1152, %v1325
    %v1330 = vmul.f32 %v1157, %v1325
    %v1331 = vmul.f32 %v1162, %v1325
    %v1332 = vmul.f32 %v1167, %v1325
    %v1333 = vmul.f32 %v1172, %v1325
    %v1334 = vmul.f32 %v1177, %v1325
    %v1335 = vmul.f32 %v1182, %v1325
    %v1336 = vmul.f32 %v1187, %v1325
    %v1337 = vmul.f32 %v1192, %v1325
    %v1338 = vmul.f32 %v1197, %v1325
    %v1339 = vmul.f32 %v1202, %v1325
    %v1340 = vmul.f32 %v1207, %v1325
    %v1341 = vmul.f32 %v1212, %v1325
    %v1342 = vmul.f32 %v1217, %v1325
    %v1344 = vlaneseq
    %v1345 = vshrl.u32 %v1344, 7
    %v1346 = vsub.s32 0, %v1345
    %v1347 = vrot.slane %v1320, %v1346
    %v1349 = vadd.f32 %v1327, %v1347
    %v1350 = vadd.f32 %v1328, %v1347
    %v1351 = vadd.f32 %v1329, %v1347
    %v1352 = vadd.f32 %v1330, %v1347
    %v1353 = vadd.f32 %v1331, %v1347
    %v1354 = vadd.f32 %v1332, %v1347
    %v1355 = vadd.f32 %v1333, %v1347
    %v1356 = vadd.f32 %v1334, %v1347
    %v1357 = vadd.f32 %v1335, %v1347
    %v1358 = vadd.f32 %v1336, %v1347
    %v1359 = vadd.f32 %v1337, %v1347
    %v1360 = vadd.f32 %v1338, %v1347
    %v1361 = vadd.f32 %v1339, %v1347
    %v1362 = vadd.f32 %v1340, %v1347
    %v1363 = vadd.f32 %v1341, %v1347
    %v1364 = vadd.f32 %v1342, %v1347
    %vm1365 = vcmp.gt.f32.partialorder %v1349, 0.0
    %vm1366 = vcmp.gt.f32.partialorder %v1350, 0.0
    %vm1367 = vcmp.gt.f32.partialorder %v1351, 0.0
    %vm1368 = vcmp.gt.f32.partialorder %v1352, 0.0
    %vm1369 = vcmp.gt.f32.partialorder %v1353, 0.0
    %vm1370 = vcmp.gt.f32.partialorder %v1354, 0.0
    %vm1371 = vcmp.gt.f32.partialorder %v1355, 0.0
    %vm1372 = vcmp.gt.f32.partialorder %v1356, 0.0
    %vm1373 = vcmp.gt.f32.partialorder %v1357, 0.0
    %vm1374 = vcmp.gt.f32.partialorder %v1358, 0.0
    %vm1375 = vcmp.gt.f32.partialorder %v1359, 0.0
    %vm1376 = vcmp.gt.f32.partialorder %v1360, 0.0
    %vm1377 = vcmp.gt.f32.partialorder %v1361, 0.0
    %vm1378 = vcmp.gt.f32.partialorder %v1362, 0.0
    %vm1379 = vcmp.gt.f32.partialorder %v1363, 0.0
    %vm1380 = vcmp.gt.f32.partialorder %v1364, 0.0
    %v1381 = vmul.f32 %v1349, 0.01
    %v1382 = vmul.f32 %v1350, 0.01
    %v1383 = vmul.f32 %v1351, 0.01
    %v1384 = vmul.f32 %v1352, 0.01
    %v1385 = vmul.f32 %v1353, 0.01
    %v1386 = vmul.f32 %v1354, 0.01
    %v1387 = vmul.f32 %v1355, 0.01
    %v1388 = vmul.f32 %v1356, 0.01
    %v1389 = vmul.f32 %v1357, 0.01
    %v1390 = vmul.f32 %v1358, 0.01
    %v1391 = vmul.f32 %v1359, 0.01
    %v1392 = vmul.f32 %v1360, 0.01
    %v1393 = vmul.f32 %v1361, 0.01
    %v1394 = vmul.f32 %v1362, 0.01
    %v1395 = vmul.f32 %v1363, 0.01
    %v1396 = vmul.f32 %v1364, 0.01
    %v1397 = vsel %vm1365, %v1349, %v1381
    %v1398 = vsel %vm1366, %v1350, %v1382
    %v1399 = vsel %vm1367, %v1351, %v1383
    %v1400 = vsel %vm1368, %v1352, %v1384
    %v1401 = vsel %vm1369, %v1353, %v1385
    %v1402 = vsel %vm1370, %v1354, %v1386
    %v1403 = vsel %vm1371, %v1355, %v1387
    %v1404 = vsel %vm1372, %v1356, %v1388
    %v1405 = vsel %vm1373, %v1357, %v1389
    %v1406 = vsel %vm1374, %v1358, %v1390
    %v1407 = vsel %vm1375, %v1359, %v1391
    %v1408 = vsel %vm1376, %v1360, %v1392
    %v1409 = vsel %vm1377, %v1361, %v1393
    %v1410 = vsel %vm1378, %v1362, %v1394
    %v1411 = vsel %vm1379, %v1363, %v1395
    %v1412 = vsel %vm1380, %v1364, %v1396
    %1413 = vst.msk [vmem:[%s112 + $0x1] sm:$0xff] %vm54, %v1397
    %1414 = vst.msk [vmem:[%s112 + $0x11] sm:$0xff] %vm54, %v1398
    %1415 = vst.msk [vmem:[%s112 + $0x21] sm:$0xff] %vm54, %v1399
    %1416 = vst.msk [vmem:[%s112 + $0x31] sm:$0xff] %vm54, %v1400
    %1417 = vst.msk [vmem:[%s112 + $0x41] sm:$0xff] %vm54, %v1401
    %1418 = vst.msk [vmem:[%s112 + $0x51] sm:$0xff] %vm54, %v1402
    %1419 = vst.msk [vmem:[%s112 + $0x61] sm:$0xff] %vm54, %v1403
    %1420 = vst.msk [vmem:[%s112 + $0x71] sm:$0xff] %vm54, %v1404
    %1421 = vst.msk [vmem:[%s112 + $0xa1] sm:$0xff] %vm54, %v1405
    %1422 = vst.msk [vmem:[%s112 + $0xb1] sm:$0xff] %vm54, %v1406
    %1423 = vst.msk [vmem:[%s112 + $0xc1] sm:$0xff] %vm54, %v1407
    %1424 = vst.msk [vmem:[%s112 + $0xd1] sm:$0xff] %vm54, %v1408
    %1425 = vst.msk [vmem:[%s112 + $0xe1] sm:$0xff] %vm54, %v1409
    %1426 = vst.msk [vmem:[%s112 + $0xf1] sm:$0xff] %vm54, %v1410
    %1427 = vst.msk [vmem:[%s112 + $0x101] sm:$0xff] %vm54, %v1411
    %1428 = vst.msk [vmem:[%s112 + $0x111] sm:$0xff] %vm54, %v1412
    %v1429 = vld [vmem:[#allocation6] sm:$0xff]
    %v1430 = vld [vmem:[#allocation6 + $0x8] sm:$0xff]
    %v1431 = vld [vmem:[#allocation6 + $0x10] sm:$0xff]
    %v1432 = vld [vmem:[#allocation6 + $0x18] sm:$0xff]
    %v1433 = vld [vmem:[#allocation6 + $0x20] sm:$0xff]
    %v1434 = vld [vmem:[#allocation6 + $0x28] sm:$0xff]
    %v1435 = vld [vmem:[#allocation6 + $0x30] sm:$0xff]
    %v1436 = vld [vmem:[#allocation6 + $0x38] sm:$0xff]
    %v1437 = vld [vmem:[#allocation6 + $0x40] sm:$0xff]
    %v1438 = vld [vmem:[#allocation6 + $0x48] sm:$0xff]
    %v1439 = vld [vmem:[#allocation6 + $0x50] sm:$0xff]
    %v1440 = vld [vmem:[#allocation6 + $0x58] sm:$0xff]
    %v1441 = vld [vmem:[#allocation6 + $0x60] sm:$0xff]
    %v1442 = vld [vmem:[#allocation6 + $0x68] sm:$0xff]
    %v1443 = vld [vmem:[#allocation6 + $0x70] sm:$0xff]
    %v1444 = vld [vmem:[#allocation6 + $0x78] sm:$0xff]
    %v1445 = vld [vmem:[#allocation6 + $0x80] sm:$0xff]
    %v1446 = vld [vmem:[#allocation6 + $0x88] sm:$0xff]
    %v1447 = vld [vmem:[#allocation6 + $0x90] sm:$0xff]
    %v1448 = vld [vmem:[#allocation6 + $0x98] sm:$0xff]
    %v1449 = vld [vmem:[#allocation6 + $0xa0] sm:$0xff]
    %v1450 = vld [vmem:[#allocation6 + $0xa8] sm:$0xff]
    %v1451 = vld [vmem:[#allocation6 + $0xb0] sm:$0xff]
    %v1452 = vld [vmem:[#allocation6 + $0xb8] sm:$0xff]
    %v1453 = vld [vmem:[#allocation6 + $0xc0] sm:$0xff]
    %v1454 = vld [vmem:[#allocation6 + $0xc8] sm:$0xff]
    %v1455 = vld [vmem:[#allocation6 + $0xd0] sm:$0xff]
    %v1456 = vld [vmem:[#allocation6 + $0xd8] sm:$0xff]
    %v1457 = vld [vmem:[#allocation6 + $0xe0] sm:$0xff]
    %v1458 = vld [vmem:[#allocation6 + $0xe8] sm:$0xff]
    %v1459 = vld [vmem:[#allocation6 + $0xf0] sm:$0xff]
    %v1460 = vld [vmem:[#allocation6 + $0xf8] sm:$0xff]
    %v1461 = vld [vmem:[#allocation6 + $0x100] sm:$0xff]
    %v1462 = vld [vmem:[#allocation6 + $0x108] sm:$0xff]
    %v1463 = vld [vmem:[#allocation6 + $0x110] sm:$0xff]
    %v1464 = vld [vmem:[#allocation6 + $0x118] sm:$0xff]
    %v1465 = vld [vmem:[#allocation2] sm:$0xff]
    %v1466 = vld [vmem:[#allocation2 + $0x8] sm:$0x3]
    %v1467 = vld [vmem:[#allocation2 + $0x10] sm:$0xff]
    %v1468 = vld [vmem:[#allocation2 + $0x18] sm:$0x3]
    %v1469 = vld [vmem:[#allocation2 + $0x20] sm:$0xff]
    %v1470 = vld [vmem:[#allocation2 + $0x28] sm:$0x3]
    %v1471 = vld [vmem:[#allocation2 + $0x30] sm:$0xff]
    %v1472 = vld [vmem:[#allocation2 + $0x38] sm:$0x3]
    %v1473 = vld [vmem:[#allocation2 + $0x40] sm:$0xff]
    %v1474 = vld [vmem:[#allocation2 + $0x48] sm:$0x3]
    %v1475 = vld [vmem:[#allocation2 + $0x50] sm:$0xff]
    %v1476 = vld [vmem:[#allocation2 + $0x58] sm:$0x3]
    %v1477 = vld [vmem:[#allocation2 + $0x60] sm:$0xff]
    %v1478 = vld [vmem:[#allocation2 + $0x68] sm:$0x3]
    %v1479 = vld [vmem:[#allocation2 + $0x70] sm:$0xff]
    %v1480 = vld [vmem:[#allocation2 + $0x78] sm:$0x3]
    %v1481 = vld [vmem:[#allocation2 + $0x80] sm:$0xff]
    %v1482 = vld [vmem:[#allocation2 + $0x88] sm:$0x3]
    %v1483 = vld [vmem:[#allocation2 + $0x90] sm:$0xff]
    %v1484 = vld [vmem:[#allocation2 + $0x98] sm:$0x3]
    %v1485 = vld [vmem:[#allocation2 + $0xa0] sm:$0xff]
    %v1486 = vld [vmem:[#allocation2 + $0xa8] sm:$0x3]
    %v1487 = vld [vmem:[#allocation2 + $0xb0] sm:$0xff]
    %v1488 = vld [vmem:[#allocation2 + $0xb8] sm:$0x3]
    %v1489 = vld [vmem:[#allocation2 + $0xc0] sm:$0xff]
    %v1490 = vld [vmem:[#allocation2 + $0xc8] sm:$0x3]
    %v1491 = vld [vmem:[#allocation2 + $0xd0] sm:$0xff]
    %v1492 = vld [vmem:[#allocation2 + $0xd8] sm:$0x3]
    %v1493 = vld [vmem:[#allocation2 + $0xe0] sm:$0xff]
    %v1494 = vld [vmem:[#allocation2 + $0xe8] sm:$0x3]
    %v1495 = vld [vmem:[#allocation2 + $0xf0] sm:$0xff]
    %v1496 = vld [vmem:[#allocation2 + $0xf8] sm:$0x3]
    %v1497 = vld [vmem:[#allocation2 + $0x100] sm:$0xff]
    %v1498 = vld [vmem:[#allocation2 + $0x108] sm:$0x3]
    %v1499 = vld [vmem:[#allocation2 + $0x110] sm:$0xff]
    %v1500 = vld [vmem:[#allocation2 + $0x118] sm:$0x3]
    %v1501 = vld [vmem:[#allocation2 + $0x120] sm:$0xff]
    %v1502 = vld [vmem:[#allocation2 + $0x128] sm:$0x3]
    %v1503 = vld [vmem:[#allocation2 + $0x130] sm:$0xff]
    %v1504 = vld [vmem:[#allocation2 + $0x138] sm:$0x3]
    %1505 = vst.msk [vmem:[#allocation3] sm:$0xff] %vm54, %v1465
    %1506 = vst.msk [vmem:[#allocation3 + $0x18] sm:$0xff] %vm54, %v1467
    %1507 = vst.msk [vmem:[#allocation3 + $0x30] sm:$0xff] %vm54, %v1469
    %1508 = vst.msk [vmem:[#allocation3 + $0x48] sm:$0xff] %vm54, %v1471
    %1509 = vst.msk [vmem:[#allocation3 + $0x60] sm:$0xff] %vm54, %v1473
    %1510 = vst.msk [vmem:[#allocation3 + $0x78] sm:$0xff] %vm54, %v1475
    %1511 = vst.msk [vmem:[#allocation3 + $0x90] sm:$0xff] %vm54, %v1477
    %1512 = vst.msk [vmem:[#allocation3 + $0xa8] sm:$0xff] %vm54, %v1479
    %1513 = vst.msk [vmem:[#allocation3 + $0xc0] sm:$0xff] %vm54, %v1485
    %1514 = vst.msk [vmem:[#allocation3 + $0xd8] sm:$0xff] %vm54, %v1487
    %1515 = vst.msk [vmem:[#allocation3 + $0xf0] sm:$0xff] %vm54, %v1489
    %1516 = vst.msk [vmem:[#allocation3 + $0x108] sm:$0xff] %vm54, %v1491
    %1517 = vst.msk [vmem:[#allocation3 + $0x120] sm:$0xff] %vm54, %v1493
    %1518 = vst.msk [vmem:[#allocation3 + $0x138] sm:$0xff] %vm54, %v1495
    %1519 = vst.msk [vmem:[#allocation3 + $0x150] sm:$0xff] %vm54, %v1497
    %1520 = vst.msk [vmem:[#allocation3 + $0x168] sm:$0xff] %vm54, %v1499
    %v1553 = vrot.slane %v1465, 1
    %v1554 = vrot.slane %v1466, 1
    %v1555 = vsel %vm253, %v1553, %v1554
    %v1556 = vrot.slane %v1467, 1
    %v1557 = vrot.slane %v1468, 1
    %v1558 = vsel %vm253, %v1556, %v1557
    %v1559 = vrot.slane %v1469, 1
    %v1560 = vrot.slane %v1470, 1
    %v1561 = vsel %vm253, %v1559, %v1560
    %v1562 = vrot.slane %v1471, 1
    %v1563 = vrot.slane %v1472, 1
    %v1564 = vsel %vm253, %v1562, %v1563
    %v1565 = vrot.slane %v1473, 1
    %v1566 = vrot.slane %v1474, 1
    %v1567 = vsel %vm253, %v1565, %v1566
    %v1568 = vrot.slane %v1475, 1
    %v1569 = vrot.slane %v1476, 1
    %v1570 = vsel %vm253, %v1568, %v1569
    %v1571 = vrot.slane %v1477, 1
    %v1572 = vrot.slane %v1478, 1
    %v1573 = vsel %vm253, %v1571, %v1572
    %v1574 = vrot.slane %v1479, 1
    %v1575 = vrot.slane %v1480, 1
    %v1576 = vsel %vm253, %v1574, %v1575
    %v1577 = vrot.slane %v1485, 1
    %v1578 = vrot.slane %v1486, 1
    %v1579 = vsel %vm253, %v1577, %v1578
    %v1580 = vrot.slane %v1487, 1
    %v1581 = vrot.slane %v1488, 1
    %v1582 = vsel %vm253, %v1580, %v1581
    %v1583 = vrot.slane %v1489, 1
    %v1584 = vrot.slane %v1490, 1
    %v1585 = vsel %vm253, %v1583, %v1584
    %v1586 = vrot.slane %v1491, 1
    %v1587 = vrot.slane %v1492, 1
    %v1588 = vsel %vm253, %v1586, %v1587
    %v1589 = vrot.slane %v1493, 1
    %v1590 = vrot.slane %v1494, 1
    %v1591 = vsel %vm253, %v1589, %v1590
    %v1592 = vrot.slane %v1495, 1
    %v1593 = vrot.slane %v1496, 1
    %v1594 = vsel %vm253, %v1592, %v1593
    %v1595 = vrot.slane %v1497, 1
    %v1596 = vrot.slane %v1498, 1
    %v1597 = vsel %vm253, %v1595, %v1596
    %v1598 = vrot.slane %v1499, 1
    %v1599 = vrot.slane %v1500, 1
    %v1600 = vsel %vm253, %v1598, %v1599
    %1601 = vrot.lane.b32.xlu0 %v1555, 32
    %v1602 = vpop.permute.xlu0 %1601
    %1603 = vrot.lane.b32.xlu0 %v1558, 32
    %v1604 = vpop.permute.xlu0 %1603
    %1605 = vrot.lane.b32.xlu0 %v1561, 32
    %v1606 = vpop.permute.xlu0 %1605
    %1607 = vrot.lane.b32.xlu0 %v1564, 32
    %v1608 = vpop.permute.xlu0 %1607
    %1609 = vrot.lane.b32.xlu0 %v1567, 32
    %v1610 = vpop.permute.xlu0 %1609
    %1611 = vrot.lane.b32.xlu0 %v1570, 32
    %v1612 = vpop.permute.xlu0 %1611
    %1613 = vrot.lane.b32.xlu0 %v1573, 32
    %v1614 = vpop.permute.xlu0 %1613
    %1615 = vrot.lane.b32.xlu0 %v1576, 32
    %v1616 = vpop.permute.xlu0 %1615
    %1617 = vrot.lane.b32.xlu0 %v1579, 32
    %v1618 = vpop.permute.xlu0 %1617
    %1619 = vrot.lane.b32.xlu0 %v1582, 32
    %v1620 = vpop.permute.xlu0 %1619
    %1621 = vrot.lane.b32.xlu0 %v1585, 32
    %v1622 = vpop.permute.xlu0 %1621
    %1623 = vrot.lane.b32.xlu0 %v1588, 32
    %v1624 = vpop.permute.xlu0 %1623
    %1625 = vrot.lane.b32.xlu0 %v1591, 32
    %v1626 = vpop.permute.xlu0 %1625
    %1627 = vrot.lane.b32.xlu0 %v1594, 32
    %v1628 = vpop.permute.xlu0 %1627
    %1629 = vrot.lane.b32.xlu0 %v1597, 32
    %v1630 = vpop.permute.xlu0 %1629
    %1631 = vrot.lane.b32.xlu0 %v1600, 32
    %v1632 = vpop.permute.xlu0 %1631
    %1649 = vst.msk [vmem:[#allocation3] sm:$0xff] %vm350, %v1602
    %1650 = vst.msk [vmem:[#allocation3 + $0x18] sm:$0xff] %vm350, %v1604
    %1651 = vst.msk [vmem:[#allocation3 + $0x30] sm:$0xff] %vm350, %v1606
    %1652 = vst.msk [vmem:[#allocation3 + $0x48] sm:$0xff] %vm350, %v1608
    %1653 = vst.msk [vmem:[#allocation3 + $0x60] sm:$0xff] %vm350, %v1610
    %1654 = vst.msk [vmem:[#allocation3 + $0x78] sm:$0xff] %vm350, %v1612
    %1655 = vst.msk [vmem:[#allocation3 + $0x90] sm:$0xff] %vm350, %v1614
    %1656 = vst.msk [vmem:[#allocation3 + $0xa8] sm:$0xff] %vm350, %v1616
    %1657 = vst.msk [vmem:[#allocation3 + $0xc0] sm:$0xff] %vm350, %v1618
    %1658 = vst.msk [vmem:[#allocation3 + $0xd8] sm:$0xff] %vm350, %v1620
    %1659 = vst.msk [vmem:[#allocation3 + $0xf0] sm:$0xff] %vm350, %v1622
    %1660 = vst.msk [vmem:[#allocation3 + $0x108] sm:$0xff] %vm350, %v1624
    %1661 = vst.msk [vmem:[#allocation3 + $0x120] sm:$0xff] %vm350, %v1626
    %1662 = vst.msk [vmem:[#allocation3 + $0x138] sm:$0xff] %vm350, %v1628
    %1663 = vst.msk [vmem:[#allocation3 + $0x150] sm:$0xff] %vm350, %v1630
    %1664 = vst.msk [vmem:[#allocation3 + $0x168] sm:$0xff] %vm350, %v1632
    %v1665 = vrot.slane %v1465, 2
    %v1666 = vrot.slane %v1466, 2
    %v1667 = vsel %vm367, %v1665, %v1666
    %v1668 = vrot.slane %v1467, 2
    %v1669 = vrot.slane %v1468, 2
    %v1670 = vsel %vm367, %v1668, %v1669
    %v1671 = vrot.slane %v1469, 2
    %v1672 = vrot.slane %v1470, 2
    %v1673 = vsel %vm367, %v1671, %v1672
    %v1674 = vrot.slane %v1471, 2
    %v1675 = vrot.slane %v1472, 2
    %v1676 = vsel %vm367, %v1674, %v1675
    %v1677 = vrot.slane %v1473, 2
    %v1678 = vrot.slane %v1474, 2
    %v1679 = vsel %vm367, %v1677, %v1678
    %v1680 = vrot.slane %v1475, 2
    %v1681 = vrot.slane %v1476, 2
    %v1682 = vsel %vm367, %v1680, %v1681
    %v1683 = vrot.slane %v1477, 2
    %v1684 = vrot.slane %v1478, 2
    %v1685 = vsel %vm367, %v1683, %v1684
    %v1686 = vrot.slane %v1479, 2
    %v1687 = vrot.slane %v1480, 2
    %v1688 = vsel %vm367, %v1686, %v1687
    %v1689 = vrot.slane %v1485, 2
    %v1690 = vrot.slane %v1486, 2
    %v1691 = vsel %vm367, %v1689, %v1690
    %v1692 = vrot.slane %v1487, 2
    %v1693 = vrot.slane %v1488, 2
    %v1694 = vsel %vm367, %v1692, %v1693
    %v1695 = vrot.slane %v1489, 2
    %v1696 = vrot.slane %v1490, 2
    %v1697 = vsel %vm367, %v1695, %v1696
    %v1698 = vrot.slane %v1491, 2
    %v1699 = vrot.slane %v1492, 2
    %v1700 = vsel %vm367, %v1698, %v1699
    %v1701 = vrot.slane %v1493, 2
    %v1702 = vrot.slane %v1494, 2
    %v1703 = vsel %vm367, %v1701, %v1702
    %v1704 = vrot.slane %v1495, 2
    %v1705 = vrot.slane %v1496, 2
    %v1706 = vsel %vm367, %v1704, %v1705
    %v1707 = vrot.slane %v1497, 2
    %v1708 = vrot.slane %v1498, 2
    %v1709 = vsel %vm367, %v1707, %v1708
    %v1710 = vrot.slane %v1499, 2
    %v1711 = vrot.slane %v1500, 2
    %v1712 = vsel %vm367, %v1710, %v1711
    %1713 = vrot.lane.b32.xlu0 %v1667, 64
    %v1714 = vpop.permute.xlu0 %1713
    %1715 = vrot.lane.b32.xlu0 %v1670, 64
    %v1716 = vpop.permute.xlu0 %1715
    %1717 = vrot.lane.b32.xlu0 %v1673, 64
    %v1718 = vpop.permute.xlu0 %1717
    %1719 = vrot.lane.b32.xlu0 %v1676, 64
    %v1720 = vpop.permute.xlu0 %1719
    %1721 = vrot.lane.b32.xlu0 %v1679, 64
    %v1722 = vpop.permute.xlu0 %1721
    %1723 = vrot.lane.b32.xlu0 %v1682, 64
    %v1724 = vpop.permute.xlu0 %1723
    %1725 = vrot.lane.b32.xlu0 %v1685, 64
    %v1726 = vpop.permute.xlu0 %1725
    %1727 = vrot.lane.b32.xlu0 %v1688, 64
    %v1728 = vpop.permute.xlu0 %1727
    %1729 = vrot.lane.b32.xlu0 %v1691, 64
    %v1730 = vpop.permute.xlu0 %1729
    %1731 = vrot.lane.b32.xlu0 %v1694, 64
    %v1732 = vpop.permute.xlu0 %1731
    %1733 = vrot.lane.b32.xlu0 %v1697, 64
    %v1734 = vpop.permute.xlu0 %1733
    %1735 = vrot.lane.b32.xlu0 %v1700, 64
    %v1736 = vpop.permute.xlu0 %1735
    %1737 = vrot.lane.b32.xlu0 %v1703, 64
    %v1738 = vpop.permute.xlu0 %1737
    %1739 = vrot.lane.b32.xlu0 %v1706, 64
    %v1740 = vpop.permute.xlu0 %1739
    %1741 = vrot.lane.b32.xlu0 %v1709, 64
    %v1742 = vpop.permute.xlu0 %1741
    %1743 = vrot.lane.b32.xlu0 %v1712, 64
    %v1744 = vpop.permute.xlu0 %1743
    %1761 = vst.msk [vmem:[#allocation3] sm:$0xff] %vm464, %v1714
    %1762 = vst.msk [vmem:[#allocation3 + $0x18] sm:$0xff] %vm464, %v1716
    %1763 = vst.msk [vmem:[#allocation3 + $0x30] sm:$0xff] %vm464, %v1718
    %1764 = vst.msk [vmem:[#allocation3 + $0x48] sm:$0xff] %vm464, %v1720
    %1765 = vst.msk [vmem:[#allocation3 + $0x60] sm:$0xff] %vm464, %v1722
    %1766 = vst.msk [vmem:[#allocation3 + $0x78] sm:$0xff] %vm464, %v1724
    %1767 = vst.msk [vmem:[#allocation3 + $0x90] sm:$0xff] %vm464, %v1726
    %1768 = vst.msk [vmem:[#allocation3 + $0xa8] sm:$0xff] %vm464, %v1728
    %1769 = vst.msk [vmem:[#allocation3 + $0xc0] sm:$0xff] %vm464, %v1730
    %1770 = vst.msk [vmem:[#allocation3 + $0xd8] sm:$0xff] %vm464, %v1732
    %1771 = vst.msk [vmem:[#allocation3 + $0xf0] sm:$0xff] %vm464, %v1734
    %1772 = vst.msk [vmem:[#allocation3 + $0x108] sm:$0xff] %vm464, %v1736
    %1773 = vst.msk [vmem:[#allocation3 + $0x120] sm:$0xff] %vm464, %v1738
    %1774 = vst.msk [vmem:[#allocation3 + $0x138] sm:$0xff] %vm464, %v1740
    %1775 = vst.msk [vmem:[#allocation3 + $0x150] sm:$0xff] %vm464, %v1742
    %1776 = vst.msk [vmem:[#allocation3 + $0x168] sm:$0xff] %vm464, %v1744
    %1779 = vrot.lane.b32.xlu0 %v1467, 96
    %v1780 = vpop.permute.xlu0 %1779
    %1781 = vrot.lane.b32.xlu0 %v1469, 96
    %v1782 = vpop.permute.xlu0 %1781
    %1783 = vrot.lane.b32.xlu0 %v1471, 96
    %v1784 = vpop.permute.xlu0 %1783
    %1785 = vrot.lane.b32.xlu0 %v1473, 96
    %v1786 = vpop.permute.xlu0 %1785
    %1787 = vrot.lane.b32.xlu0 %v1475, 96
    %v1788 = vpop.permute.xlu0 %1787
    %1789 = vrot.lane.b32.xlu0 %v1477, 96
    %v1790 = vpop.permute.xlu0 %1789
    %1791 = vrot.lane.b32.xlu0 %v1479, 96
    %v1792 = vpop.permute.xlu0 %1791
    %1793 = vrot.lane.b32.xlu0 %v1481, 96
    %v1794 = vpop.permute.xlu0 %1793
    %1795 = vrot.lane.b32.xlu0 %v1487, 96
    %v1796 = vpop.permute.xlu0 %1795
    %1797 = vrot.lane.b32.xlu0 %v1489, 96
    %v1798 = vpop.permute.xlu0 %1797
    %1799 = vrot.lane.b32.xlu0 %v1491, 96
    %v1800 = vpop.permute.xlu0 %1799
    %1801 = vrot.lane.b32.xlu0 %v1493, 96
    %v1802 = vpop.permute.xlu0 %1801
    %1803 = vrot.lane.b32.xlu0 %v1495, 96
    %v1804 = vpop.permute.xlu0 %1803
    %1805 = vrot.lane.b32.xlu0 %v1497, 96
    %v1806 = vpop.permute.xlu0 %1805
    %1807 = vrot.lane.b32.xlu0 %v1499, 96
    %v1808 = vpop.permute.xlu0 %1807
    %1809 = vrot.lane.b32.xlu0 %v1501, 96
    %v1810 = vpop.permute.xlu0 %1809
    %1827 = vst.msk [vmem:[#allocation3] sm:$0xff] %vm531, %v1780
    %1828 = vst.msk [vmem:[#allocation3 + $0x18] sm:$0xff] %vm531, %v1782
    %1829 = vst.msk [vmem:[#allocation3 + $0x30] sm:$0xff] %vm531, %v1784
    %1830 = vst.msk [vmem:[#allocation3 + $0x48] sm:$0xff] %vm531, %v1786
    %1831 = vst.msk [vmem:[#allocation3 + $0x60] sm:$0xff] %vm531, %v1788
    %1832 = vst.msk [vmem:[#allocation3 + $0x78] sm:$0xff] %vm531, %v1790
    %1833 = vst.msk [vmem:[#allocation3 + $0x90] sm:$0xff] %vm531, %v1792
    %1834 = vst.msk [vmem:[#allocation3 + $0xa8] sm:$0xff] %vm531, %v1794
    %1835 = vst.msk [vmem:[#allocation3 + $0xc0] sm:$0xff] %vm531, %v1796
    %1836 = vst.msk [vmem:[#allocation3 + $0xd8] sm:$0xff] %vm531, %v1798
    %1837 = vst.msk [vmem:[#allocation3 + $0xf0] sm:$0xff] %vm531, %v1800
    %1838 = vst.msk [vmem:[#allocation3 + $0x108] sm:$0xff] %vm531, %v1802
    %1839 = vst.msk [vmem:[#allocation3 + $0x120] sm:$0xff] %vm531, %v1804
    %1840 = vst.msk [vmem:[#allocation3 + $0x138] sm:$0xff] %vm531, %v1806
    %1841 = vst.msk [vmem:[#allocation3 + $0x150] sm:$0xff] %vm531, %v1808
    %1842 = vst.msk [vmem:[#allocation3 + $0x168] sm:$0xff] %vm531, %v1810
    %v1845 = vrot.slane %v1481, 1
    %v1846 = vrot.slane %v1482, 1
    %v1847 = vsel %vm253, %v1845, %v1846
    %v1848 = vrot.slane %v1501, 1
    %v1849 = vrot.slane %v1502, 1
    %v1850 = vsel %vm253, %v1848, %v1849
    %1867 = vst.msk [vmem:[#allocation3 + $0x8] sm:$0xff] %vm54, %v1558
    %1868 = vst.msk [vmem:[#allocation3 + $0x20] sm:$0xff] %vm54, %v1561
    %1869 = vst.msk [vmem:[#allocation3 + $0x38] sm:$0xff] %vm54, %v1564
    %1870 = vst.msk [vmem:[#allocation3 + $0x50] sm:$0xff] %vm54, %v1567
    %1871 = vst.msk [vmem:[#allocation3 + $0x68] sm:$0xff] %vm54, %v1570
    %1872 = vst.msk [vmem:[#allocation3 + $0x80] sm:$0xff] %vm54, %v1573
    %1873 = vst.msk [vmem:[#allocation3 + $0x98] sm:$0xff] %vm54, %v1576
    %1874 = vst.msk [vmem:[#allocation3 + $0xb0] sm:$0xff] %vm54, %v1847
    %1875 = vst.msk [vmem:[#allocation3 + $0xc8] sm:$0xff] %vm54, %v1582
    %1876 = vst.msk [vmem:[#allocation3 + $0xe0] sm:$0xff] %vm54, %v1585
    %1877 = vst.msk [vmem:[#allocation3 + $0xf8] sm:$0xff] %vm54, %v1588
    %1878 = vst.msk [vmem:[#allocation3 + $0x110] sm:$0xff] %vm54, %v1591
    %1879 = vst.msk [vmem:[#allocation3 + $0x128] sm:$0xff] %vm54, %v1594
    %1880 = vst.msk [vmem:[#allocation3 + $0x140] sm:$0xff] %vm54, %v1597
    %1881 = vst.msk [vmem:[#allocation3 + $0x158] sm:$0xff] %vm54, %v1600
    %1882 = vst.msk [vmem:[#allocation3 + $0x170] sm:$0xff] %vm54, %v1850
    %v1883 = vrot.slane %v1481, 2
    %v1884 = vrot.slane %v1482, 2
    %v1885 = vsel %vm367, %v1883, %v1884
    %v1886 = vrot.slane %v1501, 2
    %v1887 = vrot.slane %v1502, 2
    %v1888 = vsel %vm367, %v1886, %v1887
    %1889 = vrot.lane.b32.xlu0 %v1670, 32
    %v1890 = vpop.permute.xlu0 %1889
    %1891 = vrot.lane.b32.xlu0 %v1673, 32
    %v1892 = vpop.permute.xlu0 %1891
    %1893 = vrot.lane.b32.xlu0 %v1676, 32
    %v1894 = vpop.permute.xlu0 %1893
    %1895 = vrot.lane.b32.xlu0 %v1679, 32
    %v1896 = vpop.permute.xlu0 %1895
    %1897 = vrot.lane.b32.xlu0 %v1682, 32
    %v1898 = vpop.permute.xlu0 %1897
    %1899 = vrot.lane.b32.xlu0 %v1685, 32
    %v1900 = vpop.permute.xlu0 %1899
    %1901 = vrot.lane.b32.xlu0 %v1688, 32
    %v1902 = vpop.permute.xlu0 %1901
    %1903 = vrot.lane.b32.xlu0 %v1885, 32
    %v1904 = vpop.permute.xlu0 %1903
    %1905 = vrot.lane.b32.xlu0 %v1694, 32
    %v1906 = vpop.permute.xlu0 %1905
    %1907 = vrot.lane.b32.xlu0 %v1697, 32
    %v1908 = vpop.permute.xlu0 %1907
    %1909 = vrot.lane.b32.xlu0 %v1700, 32
    %v1910 = vpop.permute.xlu0 %1909
    %1911 = vrot.lane.b32.xlu0 %v1703, 32
    %v1912 = vpop.permute.xlu0 %1911
    %1913 = vrot.lane.b32.xlu0 %v1706, 32
    %v1914 = vpop.permute.xlu0 %1913
    %1915 = vrot.lane.b32.xlu0 %v1709, 32
    %v1916 = vpop.permute.xlu0 %1915
    %1917 = vrot.lane.b32.xlu0 %v1712, 32
    %v1918 = vpop.permute.xlu0 %1917
    %1919 = vrot.lane.b32.xlu0 %v1888, 32
    %v1920 = vpop.permute.xlu0 %1919
    %1937 = vst.msk [vmem:[#allocation3 + $0x8] sm:$0xff] %vm350, %v1890
    %1938 = vst.msk [vmem:[#allocation3 + $0x20] sm:$0xff] %vm350, %v1892
    %1939 = vst.msk [vmem:[#allocation3 + $0x38] sm:$0xff] %vm350, %v1894
    %1940 = vst.msk [vmem:[#allocation3 + $0x50] sm:$0xff] %vm350, %v1896
    %1941 = vst.msk [vmem:[#allocation3 + $0x68] sm:$0xff] %vm350, %v1898
    %1942 = vst.msk [vmem:[#allocation3 + $0x80] sm:$0xff] %vm350, %v1900
    %1943 = vst.msk [vmem:[#allocation3 + $0x98] sm:$0xff] %vm350, %v1902
    %1944 = vst.msk [vmem:[#allocation3 + $0xb0] sm:$0xff] %vm350, %v1904
    %1945 = vst.msk [vmem:[#allocation3 + $0xc8] sm:$0xff] %vm350, %v1906
    %1946 = vst.msk [vmem:[#allocation3 + $0xe0] sm:$0xff] %vm350, %v1908
    %1947 = vst.msk [vmem:[#allocation3 + $0xf8] sm:$0xff] %vm350, %v1910
    %1948 = vst.msk [vmem:[#allocation3 + $0x110] sm:$0xff] %vm350, %v1912
    %1949 = vst.msk [vmem:[#allocation3 + $0x128] sm:$0xff] %vm350, %v1914
    %1950 = vst.msk [vmem:[#allocation3 + $0x140] sm:$0xff] %vm350, %v1916
    %1951 = vst.msk [vmem:[#allocation3 + $0x158] sm:$0xff] %vm350, %v1918
    %1952 = vst.msk [vmem:[#allocation3 + $0x170] sm:$0xff] %vm350, %v1920
    %1955 = vrot.lane.b32.xlu0 %v1469, 64
    %v1956 = vpop.permute.xlu0 %1955
    %1957 = vrot.lane.b32.xlu0 %v1471, 64
    %v1958 = vpop.permute.xlu0 %1957
    %1959 = vrot.lane.b32.xlu0 %v1473, 64
    %v1960 = vpop.permute.xlu0 %1959
    %1961 = vrot.lane.b32.xlu0 %v1475, 64
    %v1962 = vpop.permute.xlu0 %1961
    %1963 = vrot.lane.b32.xlu0 %v1477, 64
    %v1964 = vpop.permute.xlu0 %1963
    %1965 = vrot.lane.b32.xlu0 %v1479, 64
    %v1966 = vpop.permute.xlu0 %1965
    %1967 = vrot.lane.b32.xlu0 %v1481, 64
    %v1968 = vpop.permute.xlu0 %1967
    %1969 = vrot.lane.b32.xlu0 %v1483, 64
    %v1970 = vpop.permute.xlu0 %1969
    %1971 = vrot.lane.b32.xlu0 %v1489, 64
    %v1972 = vpop.permute.xlu0 %1971
    %1973 = vrot.lane.b32.xlu0 %v1491, 64
    %v1974 = vpop.permute.xlu0 %1973
    %1975 = vrot.lane.b32.xlu0 %v1493, 64
    %v1976 = vpop.permute.xlu0 %1975
    %1977 = vrot.lane.b32.xlu0 %v1495, 64
    %v1978 = vpop.permute.xlu0 %1977
    %1979 = vrot.lane.b32.xlu0 %v1497, 64
    %v1980 = vpop.permute.xlu0 %1979
    %1981 = vrot.lane.b32.xlu0 %v1499, 64
    %v1982 = vpop.permute.xlu0 %1981
    %1983 = vrot.lane.b32.xlu0 %v1501, 64
    %v1984 = vpop.permute.xlu0 %1983
    %1985 = vrot.lane.b32.xlu0 %v1503, 64
    %v1986 = vpop.permute.xlu0 %1985
    %2003 = vst.msk [vmem:[#allocation3 + $0x8] sm:$0xff] %vm464, %v1956
    %2004 = vst.msk [vmem:[#allocation3 + $0x20] sm:$0xff] %vm464, %v1958
    %2005 = vst.msk [vmem:[#allocation3 + $0x38] sm:$0xff] %vm464, %v1960
    %2006 = vst.msk [vmem:[#allocation3 + $0x50] sm:$0xff] %vm464, %v1962
    %2007 = vst.msk [vmem:[#allocation3 + $0x68] sm:$0xff] %vm464, %v1964
    %2008 = vst.msk [vmem:[#allocation3 + $0x80] sm:$0xff] %vm464, %v1966
    %2009 = vst.msk [vmem:[#allocation3 + $0x98] sm:$0xff] %vm464, %v1968
    %2010 = vst.msk [vmem:[#allocation3 + $0xb0] sm:$0xff] %vm464, %v1970
    %2011 = vst.msk [vmem:[#allocation3 + $0xc8] sm:$0xff] %vm464, %v1972
    %2012 = vst.msk [vmem:[#allocation3 + $0xe0] sm:$0xff] %vm464, %v1974
    %2013 = vst.msk [vmem:[#allocation3 + $0xf8] sm:$0xff] %vm464, %v1976
    %2014 = vst.msk [vmem:[#allocation3 + $0x110] sm:$0xff] %vm464, %v1978
    %2015 = vst.msk [vmem:[#allocation3 + $0x128] sm:$0xff] %vm464, %v1980
    %2016 = vst.msk [vmem:[#allocation3 + $0x140] sm:$0xff] %vm464, %v1982
    %2017 = vst.msk [vmem:[#allocation3 + $0x158] sm:$0xff] %vm464, %v1984
    %2018 = vst.msk [vmem:[#allocation3 + $0x170] sm:$0xff] %vm464, %v1986
    %v2021 = vrot.slane %v1483, 1
    %v2022 = vrot.slane %v1484, 1
    %v2023 = vsel %vm253, %v2021, %v2022
    %v2024 = vrot.slane %v1503, 1
    %v2025 = vrot.slane %v1504, 1
    %v2026 = vsel %vm253, %v2024, %v2025
    %2027 = vrot.lane.b32.xlu0 %v1561, 96
    %v2028 = vpop.permute.xlu0 %2027
    %2029 = vrot.lane.b32.xlu0 %v1564, 96
    %v2030 = vpop.permute.xlu0 %2029
    %2031 = vrot.lane.b32.xlu0 %v1567, 96
    %v2032 = vpop.permute.xlu0 %2031
    %2033 = vrot.lane.b32.xlu0 %v1570, 96
    %v2034 = vpop.permute.xlu0 %2033
    %2035 = vrot.lane.b32.xlu0 %v1573, 96
    %v2036 = vpop.permute.xlu0 %2035
    %2037 = vrot.lane.b32.xlu0 %v1576, 96
    %v2038 = vpop.permute.xlu0 %2037
    %2039 = vrot.lane.b32.xlu0 %v1847, 96
    %v2040 = vpop.permute.xlu0 %2039
    %2041 = vrot.lane.b32.xlu0 %v2023, 96
    %v2042 = vpop.permute.xlu0 %2041
    %2043 = vrot.lane.b32.xlu0 %v1585, 96
    %v2044 = vpop.permute.xlu0 %2043
    %2045 = vrot.lane.b32.xlu0 %v1588, 96
    %v2046 = vpop.permute.xlu0 %2045
    %2047 = vrot.lane.b32.xlu0 %v1591, 96
    %v2048 = vpop.permute.xlu0 %2047
    %2049 = vrot.lane.b32.xlu0 %v1594, 96
    %v2050 = vpop.permute.xlu0 %2049
    %2051 = vrot.lane.b32.xlu0 %v1597, 96
    %v2052 = vpop.permute.xlu0 %2051
    %2053 = vrot.lane.b32.xlu0 %v1600, 96
    %v2054 = vpop.permute.xlu0 %2053
    %2055 = vrot.lane.b32.xlu0 %v1850, 96
    %v2056 = vpop.permute.xlu0 %2055
    %2057 = vrot.lane.b32.xlu0 %v2026, 96
    %v2058 = vpop.permute.xlu0 %2057
    %2075 = vst.msk [vmem:[#allocation3 + $0x8] sm:$0xff] %vm531, %v2028
    %2076 = vst.msk [vmem:[#allocation3 + $0x20] sm:$0xff] %vm531, %v2030
    %2077 = vst.msk [vmem:[#allocation3 + $0x38] sm:$0xff] %vm531, %v2032
    %2078 = vst.msk [vmem:[#allocation3 + $0x50] sm:$0xff] %vm531, %v2034
    %2079 = vst.msk [vmem:[#allocation3 + $0x68] sm:$0xff] %vm531, %v2036
    %2080 = vst.msk [vmem:[#allocation3 + $0x80] sm:$0xff] %vm531, %v2038
    %2081 = vst.msk [vmem:[#allocation3 + $0x98] sm:$0xff] %vm531, %v2040
    %2082 = vst.msk [vmem:[#allocation3 + $0xb0] sm:$0xff] %vm531, %v2042
    %2083 = vst.msk [vmem:[#allocation3 + $0xc8] sm:$0xff] %vm531, %v2044
    %2084 = vst.msk [vmem:[#allocation3 + $0xe0] sm:$0xff] %vm531, %v2046
    %2085 = vst.msk [vmem:[#allocation3 + $0xf8] sm:$0xff] %vm531, %v2048
    %2086 = vst.msk [vmem:[#allocation3 + $0x110] sm:$0xff] %vm531, %v2050
    %2087 = vst.msk [vmem:[#allocation3 + $0x128] sm:$0xff] %vm531, %v2052
    %2088 = vst.msk [vmem:[#allocation3 + $0x140] sm:$0xff] %vm531, %v2054
    %2089 = vst.msk [vmem:[#allocation3 + $0x158] sm:$0xff] %vm531, %v2056
    %2090 = vst.msk [vmem:[#allocation3 + $0x170] sm:$0xff] %vm531, %v2058
    %v2091 = vrot.slane %v1483, 2
    %v2092 = vrot.slane %v1484, 2
    %v2093 = vsel %vm367, %v2091, %v2092
    %v2094 = vrot.slane %v1503, 2
    %v2095 = vrot.slane %v1504, 2
    %v2096 = vsel %vm367, %v2094, %v2095
    %2113 = vst.msk [vmem:[#allocation3 + $0x10] sm:$0xff] %vm54, %v1673
    %2114 = vst.msk [vmem:[#allocation3 + $0x28] sm:$0xff] %vm54, %v1676
    %2115 = vst.msk [vmem:[#allocation3 + $0x40] sm:$0xff] %vm54, %v1679
    %2116 = vst.msk [vmem:[#allocation3 + $0x58] sm:$0xff] %vm54, %v1682
    %2117 = vst.msk [vmem:[#allocation3 + $0x70] sm:$0xff] %vm54, %v1685
    %2118 = vst.msk [vmem:[#allocation3 + $0x88] sm:$0xff] %vm54, %v1688
    %2119 = vst.msk [vmem:[#allocation3 + $0xa0] sm:$0xff] %vm54, %v1885
    %2120 = vst.msk [vmem:[#allocation3 + $0xb8] sm:$0xff] %vm54, %v2093
    %2121 = vst.msk [vmem:[#allocation3 + $0xd0] sm:$0xff] %vm54, %v1697
    %2122 = vst.msk [vmem:[#allocation3 + $0xe8] sm:$0xff] %vm54, %v1700
    %2123 = vst.msk [vmem:[#allocation3 + $0x100] sm:$0xff] %vm54, %v1703
    %2124 = vst.msk [vmem:[#allocation3 + $0x118] sm:$0xff] %vm54, %v1706
    %2125 = vst.msk [vmem:[#allocation3 + $0x130] sm:$0xff] %vm54, %v1709
    %2126 = vst.msk [vmem:[#allocation3 + $0x148] sm:$0xff] %vm54, %v1712
    %2127 = vst.msk [vmem:[#allocation3 + $0x160] sm:$0xff] %vm54, %v1888
    %2128 = vst.msk [vmem:[#allocation3 + $0x178] sm:$0xff] %vm54, %v2096
    %v2129 = vld [vmem:[#allocation3] sm:$0xff]
    %v2130 = vld [vmem:[#allocation3 + $0x8] sm:$0xff]
    %v2131 = vld [vmem:[#allocation3 + $0x10] sm:$0xff]
    %v2132 = vld [vmem:[#allocation3 + $0x18] sm:$0xff]
    %v2133 = vld [vmem:[#allocation3 + $0x20] sm:$0xff]
    %v2134 = vld [vmem:[#allocation3 + $0x28] sm:$0xff]
    %v2135 = vld [vmem:[#allocation3 + $0x30] sm:$0xff]
    %v2136 = vld [vmem:[#allocation3 + $0x38] sm:$0xff]
    %v2137 = vld [vmem:[#allocation3 + $0x40] sm:$0xff]
    %v2138 = vld [vmem:[#allocation3 + $0x48] sm:$0xff]
    %v2139 = vld [vmem:[#allocation3 + $0x50] sm:$0xff]
    %v2140 = vld [vmem:[#allocation3 + $0x58] sm:$0xff]
    %v2141 = vld [vmem:[#allocation3 + $0x60] sm:$0xff]
    %v2142 = vld [vmem:[#allocation3 + $0x68] sm:$0xff]
    %v2143 = vld [vmem:[#allocation3 + $0x70] sm:$0xff]
    %v2144 = vld [vmem:[#allocation3 + $0x78] sm:$0xff]
    %v2145 = vld [vmem:[#allocation3 + $0x80] sm:$0xff]
    %v2146 = vld [vmem:[#allocation3 + $0x88] sm:$0xff]
    %v2147 = vld [vmem:[#allocation3 + $0x90] sm:$0xff]
    %v2148 = vld [vmem:[#allocation3 + $0x98] sm:$0xff]
    %v2149 = vld [vmem:[#allocation3 + $0xa0] sm:$0xff]
    %v2150 = vld [vmem:[#allocation3 + $0xa8] sm:$0xff]
    %v2151 = vld [vmem:[#allocation3 + $0xb0] sm:$0xff]
    %v2152 = vld [vmem:[#allocation3 + $0xb8] sm:$0xff]
    %v2153 = vld [vmem:[#allocation3 + $0xc0] sm:$0xff]
    %v2154 = vld [vmem:[#allocation3 + $0xc8] sm:$0xff]
    %v2155 = vld [vmem:[#allocation3 + $0xd0] sm:$0xff]
    %v2156 = vld [vmem:[#allocation3 + $0xd8] sm:$0xff]
    %v2157 = vld [vmem:[#allocation3 + $0xe0] sm:$0xff]
    %v2158 = vld [vmem:[#allocation3 + $0xe8] sm:$0xff]
    %v2159 = vld [vmem:[#allocation3 + $0xf0] sm:$0xff]
    %v2160 = vld [vmem:[#allocation3 + $0xf8] sm:$0xff]
    %v2161 = vld [vmem:[#allocation3 + $0x100] sm:$0xff]
    %v2162 = vld [vmem:[#allocation3 + $0x108] sm:$0xff]
    %v2163 = vld [vmem:[#allocation3 + $0x110] sm:$0xff]
    %v2164 = vld [vmem:[#allocation3 + $0x118] sm:$0xff]
    %v2165 = vld [vmem:[#allocation3 + $0x120] sm:$0xff]
    %v2166 = vld [vmem:[#allocation3 + $0x128] sm:$0xff]
    %v2167 = vld [vmem:[#allocation3 + $0x130] sm:$0xff]
    %v2168 = vld [vmem:[#allocation3 + $0x138] sm:$0xff]
    %v2169 = vld [vmem:[#allocation3 + $0x140] sm:$0xff]
    %v2170 = vld [vmem:[#allocation3 + $0x148] sm:$0xff]
    %v2171 = vld [vmem:[#allocation3 + $0x150] sm:$0xff]
    %v2172 = vld [vmem:[#allocation3 + $0x158] sm:$0xff]
    %v2173 = vld [vmem:[#allocation3 + $0x160] sm:$0xff]
    %v2174 = vld [vmem:[#allocation3 + $0x168] sm:$0xff]
    %v2175 = vld [vmem:[#allocation3 + $0x170] sm:$0xff]
    %v2176 = vld [vmem:[#allocation3 + $0x178] sm:$0xff]
    %v2178 = vsel %vm54, %v2131, 0
    %v2181 = vsel %vm54, %v2134, 0
    %v2184 = vsel %vm54, %v2137, 0
    %v2187 = vsel %vm54, %v2140, 0
    %v2190 = vsel %vm54, %v2143, 0
    %v2193 = vsel %vm54, %v2146, 0
    %v2196 = vsel %vm54, %v2149, 0
    %v2199 = vsel %vm54, %v2152, 0
    %v2202 = vsel %vm54, %v2155, 0
    %v2205 = vsel %vm54, %v2158, 0
    %v2208 = vsel %vm54, %v2161, 0
    %v2211 = vsel %vm54, %v2164, 0
    %v2214 = vsel %vm54, %v2167, 0
    %v2217 = vsel %vm54, %v2170, 0
    %v2220 = vsel %vm54, %v2173, 0
    %v2223 = vsel %vm54, %v2176, 0
    %2225 = vmatprep.subr.mxu0 0.0
    %2226 = vmatpush1.msra.mxu0 %v1429
    %2227 = vmatprep.subr.mxu0 0.0
    %2228 = vmatpush1.msra.mxu0 %v1430
    %2229 = vmatprep.subr.mxu0 0.0
    %2230 = vmatpush1.msra.mxu0 %v1431
    %2231 = vmatprep.subr.mxu0 0.0
    %2232 = vmatpush1.msra.mxu0 %v1432
    %2233 = vmatprep.subr.mxu0 0.0
    %2234 = vmatpush1.msra.mxu0 %v1433
    %2235 = vmatprep.subr.mxu0 0.0
    %2236 = vmatpush1.msra.mxu0 %v1434
    %2237 = vmatprep.subr.mxu0 0.0
    %2238 = vmatpush1.msra.mxu0 %v1435
    %2239 = vmatprep.subr.mxu0 0.0
    %2240 = vmatpush1.msra.mxu0 %v1436
    %2241 = vmatprep.subr.mxu0 0.0
    %2242 = vmatpush1.msra.mxu0 %v1437
    %2243 = vmatprep.subr.mxu0 0.0
    %2244 = vmatpush1.msra.mxu0 %v1438
    %2245 = vmatprep.subr.mxu0 0.0
    %2246 = vmatpush1.msra.mxu0 %v1439
    %2247 = vmatprep.subr.mxu0 0.0
    %2248 = vmatpush1.msra.mxu0 %v1440
    %2249 = vmatprep.subr.mxu0 0.0
    %2250 = vmatpush1.msra.mxu0 %v1441
    %2251 = vmatprep.subr.mxu0 0.0
    %2252 = vmatpush1.msra.mxu0 %v1442
    %2253 = vmatprep.subr.mxu0 0.0
    %2254 = vmatpush1.msra.mxu0 %v1443
    %2255 = vmatprep.subr.mxu0 0.0
    %2256 = vmatpush1.msra.mxu0 %v1444
    %2257 = vmatprep.subr.mxu0 0.0
    %2258 = vmatpush1.msra.mxu0 %v1445
    %2259 = vmatprep.subr.mxu0 0.0
    %2260 = vmatpush1.msra.mxu0 %v1446
    %2261 = vmatprep.subr.mxu0 0.0
    %2262 = vmatpush1.msra.mxu0 %v1447
    %2263 = vmatprep.subr.mxu0 0.0
    %2264 = vmatpush1.msra.mxu0 %v1448
    %2265 = vmatprep.subr.mxu0 0.0
    %2266 = vmatpush1.msra.mxu0 %v1449
    %2267 = vmatprep.subr.mxu0 0.0
    %2268 = vmatpush1.msra.mxu0 %v1450
    %2269 = vmatprep.subr.mxu0 0.0
    %2270 = vmatpush1.msra.mxu0 %v1451
    %2271 = vmatprep.subr.mxu0 0.0
    %2272 = vmatpush1.msra.mxu0 %v1452
    %2273 = vmatprep.subr.mxu0 0.0
    %2274 = vmatpush1.msra.mxu0 %v1453
    %2275 = vmatprep.subr.mxu0 0.0
    %2276 = vmatpush1.msra.mxu0 %v1454
    %2277 = vmatprep.subr.mxu0 0.0
    %2278 = vmatpush1.msra.mxu0 %v1455
    %2279 = vmatprep.subr.mxu0 0.0
    %2280 = vmatpush1.msra.mxu0 %v1456
    %2281 = vmatprep.subr.mxu0 0.0
    %2282 = vmatpush1.msra.mxu0 %v1457
    %2283 = vmatprep.subr.mxu0 0.0
    %2284 = vmatpush1.msra.mxu0 %v1458
    %2285 = vmatprep.subr.mxu0 0.0
    %2286 = vmatpush1.msra.mxu0 %v1459
    %2287 = vmatprep.subr.mxu0 0.0
    %2288 = vmatpush1.msra.mxu0 %v1460
    %2289 = vmatprep.mubr.f32.mxu0 %v2130
    %2290 = vmatmul.mubr.f32.gmra.mrb[0].mxu0 %v2129
    %v2291 = vpop.f32.mrb[0].mxu0
    %v2292 = vadd.f32 0.0, %v2291
    %v2293 = vpop.f32.mrb[0].mxu0
    %2294 = vmatprep.mubr.f32.mxu0 %v2133
    %2295 = vmatmul.mubr.f32.gmra.mrb[0].mxu0 %v2132
    %v2296 = vpop.f32.mrb[0].mxu0
    %v2297 = vadd.f32 0.0, %v2296
    %v2298 = vpop.f32.mrb[0].mxu0
    %2299 = vmatprep.mubr.f32.mxu0 %v2136
    %2300 = vmatmul.mubr.f32.gmra.mrb[0].mxu0 %v2135
    %v2301 = vpop.f32.mrb[0].mxu0
    %v2302 = vadd.f32 0.0, %v2301
    %v2303 = vpop.f32.mrb[0].mxu0
    %2304 = vmatprep.mubr.f32.mxu0 %v2139
    %2305 = vmatmul.mubr.f32.gmra.mrb[0].mxu0 %v2138
    %v2306 = vpop.f32.mrb[0].mxu0
    %v2307 = vadd.f32 0.0, %v2306
    %v2308 = vpop.f32.mrb[0].mxu0
    %2309 = vmatprep.mubr.f32.mxu0 %v2142
    %2310 = vmatmul.mubr.f32.gmra.mrb[0].mxu0 %v2141
    %v2311 = vpop.f32.mrb[0].mxu0
    %v2312 = vadd.f32 0.0, %v2311
    %v2313 = vpop.f32.mrb[0].mxu0
    %2314 = vmatprep.mubr.f32.mxu0 %v2145
    %2315 = vmatmul.mubr.f32.gmra.mrb[0].mxu0 %v2144
    %v2316 = vpop.f32.mrb[0].mxu0
    %v2317 = vadd.f32 0.0, %v2316
    %v2318 = vpop.f32.mrb[0].mxu0
    %2319 = vmatprep.mubr.f32.mxu0 %v2148
    %2320 = vmatmul.mubr.f32.gmra.mrb[0].mxu0 %v2147
    %v2321 = vpop.f32.mrb[0].mxu0
    %v2322 = vadd.f32 0.0, %v2321
    %v2323 = vpop.f32.mrb[0].mxu0
    %2324 = vmatprep.mubr.f32.mxu0 %v2151
    %2325 = vmatmul.mubr.f32.gmra.mrb[0].mxu0 %v2150
    %v2326 = vpop.f32.mrb[0].mxu0
    %v2327 = vadd.f32 0.0, %v2326
    %v2328 = vpop.f32.mrb[0].mxu0
    %2329 = vmatprep.mubr.f32.mxu0 %v2154
    %2330 = vmatmul.mubr.f32.gmra.mrb[0].mxu0 %v2153
    %v2331 = vpop.f32.mrb[0].mxu0
    %v2332 = vadd.f32 0.0, %v2331
    %v2333 = vpop.f32.mrb[0].mxu0
    %2334 = vmatprep.mubr.f32.mxu0 %v2157
    %2335 = vmatmul.mubr.f32.gmra.mrb[0].mxu0 %v2156
    %v2336 = vpop.f32.mrb[0].mxu0
    %v2337 = vadd.f32 0.0, %v2336
    %v2338 = vpop.f32.mrb[0].mxu0
    %2339 = vmatprep.mubr.f32.mxu0 %v2160
    %2340 = vmatmul.mubr.f32.gmra.mrb[0].mxu0 %v2159
    %v2341 = vpop.f32.mrb[0].mxu0
    %v2342 = vadd.f32 0.0, %v2341
    %v2343 = vpop.f32.mrb[0].mxu0
    %2344 = vmatprep.mubr.f32.mxu0 %v2163
    %2345 = vmatmul.mubr.f32.gmra.mrb[0].mxu0 %v2162
    %v2346 = vpop.f32.mrb[0].mxu0
    %v2347 = vadd.f32 0.0, %v2346
    %v2348 = vpop.f32.mrb[0].mxu0
    %2349 = vmatprep.mubr.f32.mxu0 %v2166
    %2350 = vmatmul.mubr.f32.gmra.mrb[0].mxu0 %v2165
    %v2351 = vpop.f32.mrb[0].mxu0
    %v2352 = vadd.f32 0.0, %v2351
    %v2353 = vpop.f32.mrb[0].mxu0
    %2354 = vmatprep.mubr.f32.mxu0 %v2169
    %2355 = vmatmul.mubr.f32.gmra.mrb[0].mxu0 %v2168
    %v2356 = vpop.f32.mrb[0].mxu0
    %v2357 = vadd.f32 0.0, %v2356
    %v2358 = vpop.f32.mrb[0].mxu0
    %2359 = vmatprep.mubr.f32.mxu0 %v2172
    %2360 = vmatmul.mubr.f32.gmra.mrb[0].mxu0 %v2171
    %v2361 = vpop.f32.mrb[0].mxu0
    %v2362 = vadd.f32 0.0, %v2361
    %v2363 = vpop.f32.mrb[0].mxu0
    %2364 = vmatprep.mubr.f32.mxu0 %v2175
    %2365 = vmatmul.mubr.f32.gmra.mrb[0].mxu0 %v2174
    %v2366 = vpop.f32.mrb[0].mxu0
    %v2367 = vadd.f32 0.0, %v2366
    %v2368 = vpop.f32.mrb[0].mxu0
    %2369 = vdwg.mxu0
    %2370 = vmatprep.subr.mxu0 0.0
    %2371 = vmatpush1.msra.mxu0 %v1461
    %2372 = vmatprep.subr.mxu0 0.0
    %2373 = vmatpush1.msra.mxu0 %v1462
    %2374 = vmatprep.subr.mxu0 0.0
    %2375 = vmatpush1.msra.mxu0 %v1463
    %2376 = vmatprep.subr.mxu0 0.0
    %2377 = vmatpush1.msra.mxu0 %v1464
    %2378 = vmatprep.subr.mxu0 0.0
    %2379 = vmatpush1.msra.mxu0 0.0
    %2380 = vmatprep.subr.mxu0 0.0
    %2381 = vmatpush1.msra.mxu0 0.0
    %2382 = vmatprep.subr.mxu0 0.0
    %2383 = vmatpush1.msra.mxu0 0.0
    %2384 = vmatprep.subr.mxu0 0.0
    %2385 = vmatpush1.msra.mxu0 0.0
    %2386 = vmatprep.subr.mxu0 0.0
    %2387 = vmatpush1.msra.mxu0 0.0
    %2388 = vmatprep.subr.mxu0 0.0
    %2389 = vmatpush1.msra.mxu0 0.0
    %2390 = vmatprep.subr.mxu0 0.0
    %2391 = vmatpush1.msra.mxu0 0.0
    %2392 = vmatprep.subr.mxu0 0.0
    %2393 = vmatpush1.msra.mxu0 0.0
    %2394 = vmatprep.subr.mxu0 0.0
    %2395 = vmatpush1.msra.mxu0 0.0
    %2396 = vmatprep.subr.mxu0 0.0
    %2397 = vmatpush1.msra.mxu0 0.0
    %2398 = vmatprep.subr.mxu0 0.0
    %2399 = vmatpush1.msra.mxu0 0.0
    %2400 = vmatprep.subr.mxu0 0.0
    %2401 = vmatpush1.msra.mxu0 0.0
    %2402 = vmatprep.subr.mxu0 0.0
    %2403 = vmatpush1.msra.mxu0 0.0
    %2404 = vmatprep.subr.mxu0 0.0
    %2405 = vmatpush1.msra.mxu0 0.0
    %2406 = vmatprep.subr.mxu0 0.0
    %2407 = vmatpush1.msra.mxu0 0.0
    %2408 = vmatprep.subr.mxu0 0.0
    %2409 = vmatpush1.msra.mxu0 0.0
    %2410 = vmatprep.subr.mxu0 0.0
    %2411 = vmatpush1.msra.mxu0 0.0
    %2412 = vmatprep.subr.mxu0 0.0
    %2413 = vmatpush1.msra.mxu0 0.0
    %2414 = vmatprep.subr.mxu0 0.0
    %2415 = vmatpush1.msra.mxu0 0.0
    %2416 = vmatprep.subr.mxu0 0.0
    %2417 = vmatpush1.msra.mxu0 0.0
    %2418 = vmatprep.subr.mxu0 0.0
    %2419 = vmatpush1.msra.mxu0 0.0
    %2420 = vmatprep.subr.mxu0 0.0
    %2421 = vmatpush1.msra.mxu0 0.0
    %2422 = vmatprep.subr.mxu0 0.0
    %2423 = vmatpush1.msra.mxu0 0.0
    %2424 = vmatprep.subr.mxu0 0.0
    %2425 = vmatpush1.msra.mxu0 0.0
    %2426 = vmatprep.subr.mxu0 0.0
    %2427 = vmatpush1.msra.mxu0 0.0
    %2428 = vmatprep.subr.mxu0 0.0
    %2429 = vmatpush1.msra.mxu0 0.0
    %2430 = vmatprep.subr.mxu0 0.0
    %2431 = vmatpush1.msra.mxu0 0.0
    %2432 = vmatprep.subr.mxu0 0.0
    %2433 = vmatpush1.msra.mxu0 0.0
    %2434 = vmatprep.mubr.f32.mxu0 0.0
    %2435 = vmatmul.mubr.f32.gmra.mrb[0].mxu0 %v2178
    %v2436 = vpop.f32.mrb[0].mxu0
    %v2437 = vadd.f32 %v2292, %v2436
    %v2438 = vpop.f32.mrb[0].mxu0
    %2439 = vmatprep.mubr.f32.mxu0 0.0
    %2440 = vmatmul.mubr.f32.gmra.mrb[0].mxu0 %v2181
    %v2441 = vpop.f32.mrb[0].mxu0
    %v2442 = vadd.f32 %v2297, %v2441
    %v2443 = vpop.f32.mrb[0].mxu0
    %2444 = vmatprep.mubr.f32.mxu0 0.0
    %2445 = vmatmul.mubr.f32.gmra.mrb[0].mxu0 %v2184
    %v2446 = vpop.f32.mrb[0].mxu0
    %v2447 = vadd.f32 %v2302, %v2446
    %v2448 = vpop.f32.mrb[0].mxu0
    %2449 = vmatprep.mubr.f32.mxu0 0.0
    %2450 = vmatmul.mubr.f32.gmra.mrb[0].mxu0 %v2187
    %v2451 = vpop.f32.mrb[0].mxu0
    %v2452 = vadd.f32 %v2307, %v2451
    %v2453 = vpop.f32.mrb[0].mxu0
    %2454 = vmatprep.mubr.f32.mxu0 0.0
    %2455 = vmatmul.mubr.f32.gmra.mrb[0].mxu0 %v2190
    %v2456 = vpop.f32.mrb[0].mxu0
    %v2457 = vadd.f32 %v2312, %v2456
    %v2458 = vpop.f32.mrb[0].mxu0
    %2459 = vmatprep.mubr.f32.mxu0 0.0
    %2460 = vmatmul.mubr.f32.gmra.mrb[0].mxu0 %v2193
    %v2461 = vpop.f32.mrb[0].mxu0
    %v2462 = vadd.f32 %v2317, %v2461
    %v2463 = vpop.f32.mrb[0].mxu0
    %2464 = vmatprep.mubr.f32.mxu0 0.0
    %2465 = vmatmul.mubr.f32.gmra.mrb[0].mxu0 %v2196
    %v2466 = vpop.f32.mrb[0].mxu0
    %v2467 = vadd.f32 %v2322, %v2466
    %v2468 = vpop.f32.mrb[0].mxu0
    %2469 = vmatprep.mubr.f32.mxu0 0.0
    %2470 = vmatmul.mubr.f32.gmra.mrb[0].mxu0 %v2199
    %v2471 = vpop.f32.mrb[0].mxu0
    %v2472 = vadd.f32 %v2327, %v2471
    %v2473 = vpop.f32.mrb[0].mxu0
    %2474 = vmatprep.mubr.f32.mxu0 0.0
    %2475 = vmatmul.mubr.f32.gmra.mrb[0].mxu0 %v2202
    %v2476 = vpop.f32.mrb[0].mxu0
    %v2477 = vadd.f32 %v2332, %v2476
    %v2478 = vpop.f32.mrb[0].mxu0
    %2479 = vmatprep.mubr.f32.mxu0 0.0
    %2480 = vmatmul.mubr.f32.gmra.mrb[0].mxu0 %v2205
    %v2481 = vpop.f32.mrb[0].mxu0
    %v2482 = vadd.f32 %v2337, %v2481
    %v2483 = vpop.f32.mrb[0].mxu0
    %2484 = vmatprep.mubr.f32.mxu0 0.0
    %2485 = vmatmul.mubr.f32.gmra.mrb[0].mxu0 %v2208
    %v2486 = vpop.f32.mrb[0].mxu0
    %v2487 = vadd.f32 %v2342, %v2486
    %v2488 = vpop.f32.mrb[0].mxu0
    %2489 = vmatprep.mubr.f32.mxu0 0.0
    %2490 = vmatmul.mubr.f32.gmra.mrb[0].mxu0 %v2211
    %v2491 = vpop.f32.mrb[0].mxu0
    %v2492 = vadd.f32 %v2347, %v2491
    %v2493 = vpop.f32.mrb[0].mxu0
    %2494 = vmatprep.mubr.f32.mxu0 0.0
    %2495 = vmatmul.mubr.f32.gmra.mrb[0].mxu0 %v2214
    %v2496 = vpop.f32.mrb[0].mxu0
    %v2497 = vadd.f32 %v2352, %v2496
    %v2498 = vpop.f32.mrb[0].mxu0
    %2499 = vmatprep.mubr.f32.mxu0 0.0
    %2500 = vmatmul.mubr.f32.gmra.mrb[0].mxu0 %v2217
    %v2501 = vpop.f32.mrb[0].mxu0
    %v2502 = vadd.f32 %v2357, %v2501
    %v2503 = vpop.f32.mrb[0].mxu0
    %2504 = vmatprep.mubr.f32.mxu0 0.0
    %2505 = vmatmul.mubr.f32.gmra.mrb[0].mxu0 %v2220
    %v2506 = vpop.f32.mrb[0].mxu0
    %v2507 = vadd.f32 %v2362, %v2506
    %v2508 = vpop.f32.mrb[0].mxu0
    %2509 = vmatprep.mubr.f32.mxu0 0.0
    %2510 = vmatmul.mubr.f32.gmra.mrb[0].mxu0 %v2223
    %v2511 = vpop.f32.mrb[0].mxu0
    %v2512 = vadd.f32 %v2367, %v2511
    %v2513 = vpop.f32.mrb[0].mxu0
    %2514 = vdwg.mxu0
    %v2515 = vld [vmem:[%s5] sm:$0x1]
    %v2516 = vld [vmem:[%s6] sm:$0x1]
    %v2517 = vsel %vm54, %v2437, 0.0
    %v2518 = vsel %vm54, %v2442, 0.0
    %v2519 = vadd.f32 %v2517, %v2518
    %v2520 = vsel %vm54, %v2447, 0.0
    %v2521 = vadd.f32 %v2519, %v2520
    %v2522 = vsel %vm54, %v2452, 0.0
    %v2523 = vadd.f32 %v2521, %v2522
    %v2524 = vsel %vm54, %v2457, 0.0
    %v2525 = vadd.f32 %v2523, %v2524
    %v2526 = vsel %vm54, %v2462, 0.0
    %v2527 = vadd.f32 %v2525, %v2526
    %v2528 = vsel %vm54, %v2467, 0.0
    %v2529 = vadd.f32 %v2527, %v2528
    %v2530 = vsel %vm54, %v2472, 0.0
    %v2531 = vadd.f32 %v2529, %v2530
    %v2532 = vsel %vm54, %v2477, 0.0
    %v2533 = vadd.f32 %v2531, %v2532
    %v2534 = vsel %vm54, %v2482, 0.0
    %v2535 = vadd.f32 %v2533, %v2534
    %v2536 = vsel %vm54, %v2487, 0.0
    %v2537 = vadd.f32 %v2535, %v2536
    %v2538 = vsel %vm54, %v2492, 0.0
    %v2539 = vadd.f32 %v2537, %v2538
    %v2540 = vsel %vm54, %v2497, 0.0
    %v2541 = vadd.f32 %v2539, %v2540
    %v2542 = vsel %vm54, %v2502, 0.0
    %v2543 = vadd.f32 %v2541, %v2542
    %v2544 = vsel %vm54, %v2507, 0.0
    %v2545 = vadd.f32 %v2543, %v2544
    %v2546 = vsel %vm54, %v2512, 0.0
    %v2547 = vadd.f32 %v2545, %v2546
    %v2548 = vrot.slane %v2547, 4
    %v2549 = vadd.f32 %v2547, %v2548
    %v2550 = vrot.slane %v2549, 2
    %v2551 = vadd.f32 %v2549, %v2550
    %v2552 = vrot.slane %v2551, 1
    %v2553 = vadd.f32 %v2551, %v2552
    %v2554 = vmul.f32 %v2437, %v2437
    %v2555 = vmul.f32 %v2442, %v2442
    %v2556 = vmul.f32 %v2447, %v2447
    %v2557 = vmul.f32 %v2452, %v2452
    %v2558 = vmul.f32 %v2457, %v2457
    %v2559 = vmul.f32 %v2462, %v2462
    %v2560 = vmul.f32 %v2467, %v2467
    %v2561 = vmul.f32 %v2472, %v2472
    %v2562 = vmul.f32 %v2477, %v2477
    %v2563 = vmul.f32 %v2482, %v2482
    %v2564 = vmul.f32 %v2487, %v2487
    %v2565 = vmul.f32 %v2492, %v2492
    %v2566 = vmul.f32 %v2497, %v2497
    %v2567 = vmul.f32 %v2502, %v2502
    %v2568 = vmul.f32 %v2507, %v2507
    %v2569 = vmul.f32 %v2512, %v2512
    %v2570 = vsel %vm54, %v2554, 0.0
    %v2571 = vsel %vm54, %v2555, 0.0
    %v2572 = vadd.f32 %v2570, %v2571
    %v2573 = vsel %vm54, %v2556, 0.0
    %v2574 = vadd.f32 %v2572, %v2573
    %v2575 = vsel %vm54, %v2557, 0.0
    %v2576 = vadd.f32 %v2574, %v2575
    %v2577 = vsel %vm54, %v2558, 0.0
    %v2578 = vadd.f32 %v2576, %v2577
    %v2579 = vsel %vm54, %v2559, 0.0
    %v2580 = vadd.f32 %v2578, %v2579
    %v2581 = vsel %vm54, %v2560, 0.0
    %v2582 = vadd.f32 %v2580, %v2581
    %v2583 = vsel %vm54, %v2561, 0.0
    %v2584 = vadd.f32 %v2582, %v2583
    %v2585 = vsel %vm54, %v2562, 0.0
    %v2586 = vadd.f32 %v2584, %v2585
    %v2587 = vsel %vm54, %v2563, 0.0
    %v2588 = vadd.f32 %v2586, %v2587
    %v2589 = vsel %vm54, %v2564, 0.0
    %v2590 = vadd.f32 %v2588, %v2589
    %v2591 = vsel %vm54, %v2565, 0.0
    %v2592 = vadd.f32 %v2590, %v2591
    %v2593 = vsel %vm54, %v2566, 0.0
    %v2594 = vadd.f32 %v2592, %v2593
    %v2595 = vsel %vm54, %v2567, 0.0
    %v2596 = vadd.f32 %v2594, %v2595
    %v2597 = vsel %vm54, %v2568, 0.0
    %v2598 = vadd.f32 %v2596, %v2597
    %v2599 = vsel %vm54, %v2569, 0.0
    %v2600 = vadd.f32 %v2598, %v2599
    %v2601 = vrot.slane %v2600, 4
    %v2602 = vadd.f32 %v2600, %v2601
    %v2603 = vrot.slane %v2602, 2
    %v2604 = vadd.f32 %v2602, %v2603
    %v2605 = vrot.slane %v2604, 1
    %v2606 = vadd.f32 %v2604, %v2605
    %v2607 = vmul.f32 %v2553, 0.0078125
    %v2608 = vmul.f32 %v2606, 0.0078125
    %v2609 = vmul.f32 %v2607, %v2607
    %v2610 = vsub.f32 %v2608, %v2609
    %v2611 = vadd.f32 %v2610, 1e-05
    %v2612 = vrsqrt.pop %v2611
    %v2613 = vmul.f32 %v2515, %v2612
    %v2614 = vmul.f32 %v2607, %v2613
    %v2615 = vsub.f32 %v2516, %v2614
    %v2617 = vlaneseq
    %v2618 = vshrl.u32 %v2617, 7
    %v2619 = vsub.s32 0, %v2618
    %v2620 = vrot.slane %v2613, %v2619
    %v2622 = vmul.f32 %v2437, %v2620
    %v2623 = vmul.f32 %v2442, %v2620
    %v2624 = vmul.f32 %v2447, %v2620
    %v2625 = vmul.f32 %v2452, %v2620
    %v2626 = vmul.f32 %v2457, %v2620
    %v2627 = vmul.f32 %v2462, %v2620
    %v2628 = vmul.f32 %v2467, %v2620
    %v2629 = vmul.f32 %v2472, %v2620
    %v2630 = vmul.f32 %v2477, %v2620
    %v2631 = vmul.f32 %v2482, %v2620
    %v2632 = vmul.f32 %v2487, %v2620
    %v2633 = vmul.f32 %v2492, %v2620
    %v2634 = vmul.f32 %v2497, %v2620
    %v2635 = vmul.f32 %v2502, %v2620
    %v2636 = vmul.f32 %v2507, %v2620
    %v2637 = vmul.f32 %v2512, %v2620
    %v2639 = vlaneseq
    %v2640 = vshrl.u32 %v2639, 7
    %v2641 = vsub.s32 0, %v2640
    %v2642 = vrot.slane %v2615, %v2641
    %v2644 = vadd.f32 %v2622, %v2642
    %v2645 = vadd.f32 %v2623, %v2642
    %v2646 = vadd.f32 %v2624, %v2642
    %v2647 = vadd.f32 %v2625, %v2642
    %v2648 = vadd.f32 %v2626, %v2642
    %v2649 = vadd.f32 %v2627, %v2642
    %v2650 = vadd.f32 %v2628, %v2642
    %v2651 = vadd.f32 %v2629, %v2642
    %v2652 = vadd.f32 %v2630, %v2642
    %v2653 = vadd.f32 %v2631, %v2642
    %v2654 = vadd.f32 %v2632, %v2642
    %v2655 = vadd.f32 %v2633, %v2642
    %v2656 = vadd.f32 %v2634, %v2642
    %v2657 = vadd.f32 %v2635, %v2642
    %v2658 = vadd.f32 %v2636, %v2642
    %v2659 = vadd.f32 %v2637, %v2642
    %v2660 = vld [vmem:[%s0] sm:$0xff]
    %v2661 = vld [vmem:[%s0 + $0x8] sm:$0xff]
    %v2662 = vld [vmem:[%s0 + $0x10] sm:$0xff]
    %v2663 = vld [vmem:[%s0 + $0x18] sm:$0xff]
    %v2664 = vld [vmem:[%s0 + $0x20] sm:$0xff]
    %v2665 = vld [vmem:[%s0 + $0x28] sm:$0xff]
    %v2666 = vld [vmem:[%s0 + $0x30] sm:$0xff]
    %v2667 = vld [vmem:[%s0 + $0x38] sm:$0xff]
    %v2668 = vld [vmem:[%s0 + $0x40] sm:$0xff]
    %v2669 = vld [vmem:[%s0 + $0x48] sm:$0xff]
    %v2670 = vld [vmem:[%s0 + $0x50] sm:$0xff]
    %v2671 = vld [vmem:[%s0 + $0x58] sm:$0xff]
    %v2672 = vld [vmem:[%s0 + $0x60] sm:$0xff]
    %v2673 = vld [vmem:[%s0 + $0x68] sm:$0xff]
    %v2674 = vld [vmem:[%s0 + $0x70] sm:$0xff]
    %v2675 = vld [vmem:[%s0 + $0x78] sm:$0xff]
    %v2676 = vadd.f32 %v2644, %v2660
    %v2677 = vadd.f32 %v2645, %v2661
    %v2678 = vadd.f32 %v2646, %v2662
    %v2679 = vadd.f32 %v2647, %v2663
    %v2680 = vadd.f32 %v2648, %v2664
    %v2681 = vadd.f32 %v2649, %v2665
    %v2682 = vadd.f32 %v2650, %v2666
    %v2683 = vadd.f32 %v2651, %v2667
    %v2684 = vadd.f32 %v2652, %v2668
    %v2685 = vadd.f32 %v2653, %v2669
    %v2686 = vadd.f32 %v2654, %v2670
    %v2687 = vadd.f32 %v2655, %v2671
    %v2688 = vadd.f32 %v2656, %v2672
    %v2689 = vadd.f32 %v2657, %v2673
    %v2690 = vadd.f32 %v2658, %v2674
    %v2691 = vadd.f32 %v2659, %v2675
    %2692 = vst.msk [vmem:[%s7] sm:$0xff] %vm54, %v2676
    %2693 = vst.msk [vmem:[%s7 + $0x8] sm:$0xff] %vm54, %v2677
    %2694 = vst.msk [vmem:[%s7 + $0x10] sm:$0xff] %vm54, %v2678
    %2695 = vst.msk [vmem:[%s7 + $0x18] sm:$0xff] %vm54, %v2679
    %2696 = vst.msk [vmem:[%s7 + $0x20] sm:$0xff] %vm54, %v2680
    %2697 = vst.msk [vmem:[%s7 + $0x28] sm:$0xff] %vm54, %v2681
    %2698 = vst.msk [vmem:[%s7 + $0x30] sm:$0xff] %vm54, %v2682
    %2699 = vst.msk [vmem:[%s7 + $0x38] sm:$0xff] %vm54, %v2683
    %2700 = vst.msk [vmem:[%s7 + $0x40] sm:$0xff] %vm54, %v2684
    %2701 = vst.msk [vmem:[%s7 + $0x48] sm:$0xff] %vm54, %v2685
    %2702 = vst.msk [vmem:[%s7 + $0x50] sm:$0xff] %vm54, %v2686
    %2703 = vst.msk [vmem:[%s7 + $0x58] sm:$0xff] %vm54, %v2687
    %2704 = vst.msk [vmem:[%s7 + $0x60] sm:$0xff] %vm54, %v2688
    %2705 = vst.msk [vmem:[%s7 + $0x68] sm:$0xff] %vm54, %v2689
    %2706 = vst.msk [vmem:[%s7 + $0x70] sm:$0xff] %vm54, %v2690
    %2707 = vst.msk [vmem:[%s7 + $0x78] sm:$0xff] %vm54, %v2691
    // Predicated region
    $region38: #{resnet_block.1} parent=1 // pred_check
      _
    $region39: #{resnet_block.1} parent=1 // pred_check_branch
      %2709 = sbr.rel (0) target = $region41
    $region40: #{resnet_block.1} parent=1 // pred_region
      _
    $region41: #{resnet_block.1} parent=1 // pred_fallthru
      _
    // Predicated region
    $region42: #{resnet_block.1} parent=1 // pred_check
      _
    $region43: #{resnet_block.1} parent=1 // pred_check_branch
      %2711 = sbr.rel (0) target = $region45
    $region44: #{resnet_block.1} parent=1 // pred_region
      _
    $region45: #{resnet_block.1} parent=1 // pred_fallthru
      _
    %2712 = vsyncpa [#allocation5], 1
    %2713 = vsyncpa [#allocation7], 1

</llo_original>
